<compile_context>
chip_gen: v7x
topology: tpu7x:2x2x1
jax: 0.10.0
libtpu: 0.0.40
codegen_flags: <defaults>
</compile_context>

<pallas_src>
import jax
import jax.numpy as jnp
from jax import lax
from jax.experimental import pallas as pl
from jax.experimental.pallas import tpu as pltpu


def _build_kernel(c, hidden, pv, hw_valid, hw_pad):
    """Kernel factory; hw_valid/hw_pad are static so the key mask is compiled out if unused."""
    needs_key_mask = hw_valid != hw_pad

    def kernel(x_ref, wq_ref, bq_ref, wkv_ref, bkv_ref,
               out_ref, attn_ref, q_scr, kv_scr):
        tq = attn_ref.shape[1]
        shard = pl.program_id(1)
        qi = pl.program_id(2)
        npq = pl.num_programs(2)

        # Project Q and the fused [K ; V'] once per (batch, q-shard).  Scratch persists
        # across the q-tile ("arbitrary") axis; the shard axis is parallel, so each shard
        # recomputes the (cheap, O(HW*C*hidden)) projections for itself.
        @pl.when(qi == 0)
        def _():
            x = x_ref[0]                                            # (C, HWp) f32, channel-major
            # Q token-major (HWp, hidden).  The implied transpose of the tiny (C, HWp) lhs
            # happens once per (batch, shard) and is negligible vs the per-tile matmuls.
            q = lax.dot_general(x, wq_ref[...], (((0,), (0,)), ((), ())),
                                preferred_element_type=jnp.float32) + bq_ref[...]
            q_scr[...] = q.astype(q_scr.dtype)
            # Fused [K ; V'] channel-major; V' already has the z conv + biases folded in
            # and is zero-padded to pv rows (full sublane group).
            kv = lax.dot_general(wkv_ref[...], x, (((1,), (0,)), ((), ())),
                                 preferred_element_type=jnp.float32) + bkv_ref[...]
            kv_scr[...] = kv.astype(kv_scr.dtype)

        row = pl.multiple_of((shard * npq + qi) * tq, tq)
        q_t = q_scr[pl.ds(row, tq), :]                              # (tq, hidden)   bf16
        k = kv_scr[pl.ds(0, hidden), :]                             # (hidden, HWp)  bf16
        v = kv_scr[pl.ds(hidden, pv), :]                            # (pv, HWp)      bf16

        # scores[q, k'] — bf16 MXU operands, f32 accumulation, lane-dense output.
        scores = jnp.dot(q_t, k, preferred_element_type=jnp.float32)   # (tq, HWp) f32
        if needs_key_mask:
            col = lax.broadcasted_iota(jnp.int32, scores.shape, 1)
            scores = jnp.where(col < hw_valid, scores, jnp.float32(-1e30))

        # Exact row softmax (full key row resident), all arithmetic in f32.
        scores = scores - jnp.max(scores, axis=-1, keepdims=True)
        e = jnp.exp(scores)
        inv = pl.reciprocal(jnp.sum(e, axis=-1, keepdims=True), approx=True)
        attn = e * inv                                               # (tq, HWp) f32

        # out (C, tq) = V' . attn^T  (z conv already folded into V'); bf16 MXU operands,
        # contracting the key axis of both operands — no materialized transpose of attn.
        outp = lax.dot_general(v, attn.astype(jnp.bfloat16),
                               (((1,), (1,)), ((), ())),
                               preferred_element_type=jnp.float32)   # (pv, tq) f32
        out_ref[0] = outp[:c, :].astype(out_ref.dtype)
        attn_ref[0] = attn.astype(attn_ref.dtype)

    return kernel


def _vmem_budget():
    """(scores_tile_cap_bytes, vmem_limit_bytes) per TPU generation."""
    phys = 64 << 20                                 # conservative default = v7x (64 MiB/core)
    try:
        phys = getattr(pltpu.get_tpu_info(), "vmem_capacity_bytes", phys)
    except Exception:
        pass
    if phys >= (128 << 20):                         # v5e / v6e: 128 MiB physical VMEM
        return 12 << 20, 96 << 20
    return 6 << 20, 48 << 20                        # v7x: stay well under 64 MiB physical


def _pick_q_tile(hw_pad, cap_bytes):
    """Largest q-tile (multiple of 128, dividing hw_pad) whose f32 scores tile fits the cap."""
    best = 128                                      # lane-dense floor; vmem_limit covers huge HW
    for cand in (2048, 1024, 512, 256, 128):
        if hw_pad % cand == 0 and cand * hw_pad * 4 <= cap_bytes:
            best = cand
            break
    return min(best, hw_pad)


def self_attention(h, params, *, q_tile=None, q_shards=None, attn_dtype=None):
    """h: (B, C, H, W) NCHW like the PyTorch module. Returns (new_h, attention)."""
    B, C, H, W = h.shape
    HW = H * W
    hidden = params["wq"].shape[1]
    attn_dtype = h.dtype if attn_dtype is None else attn_dtype

    cap_bytes, vmem_limit = _vmem_budget()
    HWp = ((HW + 127) // 128) * 128                 # pad spatial axis to a lane multiple
    tq = q_tile if q_tile is not None else _pick_q_tile(HWp, cap_bytes)
    assert HWp % tq == 0 and (tq % 128 == 0 or tq == HWp)
    nq = HWp // tq

    # Split q-tiles into shards when B alone cannot fill v7x's two TensorCores.
    if q_shards is None:
        q_shards = 2 if (B % 2 == 1 and nq % 2 == 0) else 1
    assert nq % q_shards == 0
    npq = nq // q_shards

    # Channel-major token layout: pure reshape (+ zero-pad of the spatial axis if needed).
    x = h.reshape(B, C, HW)
    if HWp != HW:
        x = jnp.pad(x, ((0, 0), (0, 0), (0, HWp - HW)))

    f32 = jnp.float32
    pv = ((C + 7) // 8) * 8                         # pad V' rows to a full sublane group
    wk_t = params["wk"].T.astype(f32)                                        # (hidden, C)
    bk_c = params["bk"].T.astype(f32)                                        # (hidden, 1)
    # Fold the z 1x1 conv into V (softmax rows sum to 1):
    #   z(attn @ V) = attn @ V' with V' = (wv @ wz)^T x + (bv @ wz + bz)^T.
    wvz_t = (params["wv"].astype(f32) @ params["wz"].astype(f32)).T          # (C, C)
    bvz_c = (params["bv"].astype(f32) @ params["wz"].astype(f32)
             + params["bz"].astype(f32)).T                                   # (C, 1)
    w_kvz = jnp.concatenate([wk_t, jnp.pad(wvz_t, ((0, pv - C), (0, 0)))], axis=0)
    b_kvz = jnp.concatenate([bk_c, jnp.pad(bvz_c, ((0, pv - C), (0, 0)))], axis=0)
    wq = params["wq"].astype(f32)
    bq = params["bq"].astype(f32)

    flops = 2 * B * (q_shards * HWp * C * (2 * hidden + pv)   # projections (per shard)
                     + HWp * HWp * hidden                     # q @ k
                     + HWp * HWp * pv)                        # v' @ attn^T
    itemsize = jnp.dtype(h.dtype).itemsize
    bytes_accessed = int(itemsize * 2 * B * C * HWp
                         + jnp.dtype(attn_dtype).itemsize * B * HWp * HWp
                         + 4 * (C * hidden + hidden + (hidden + pv) * (C + 1)))

    kernel = _build_kernel(C, hidden, pv, HW, HWp)

    out, attn = pl.pallas_call(
        kernel,
        out_shape=(
            jax.ShapeDtypeStruct((B, C, HWp), h.dtype),       # new_h (channel-major, z folded)
            jax.ShapeDtypeStruct((B, HWp, HWp), attn_dtype),  # attention matrix
        ),
        grid_spec=pltpu.PrefetchScalarGridSpec(
            num_scalar_prefetch=0,
            grid=(B, q_shards, npq),
            in_specs=[
                pl.BlockSpec((1, C, HWp), lambda b, s, q: (b, 0, 0)),        # x
                pl.BlockSpec((C, hidden), lambda b, s, q: (0, 0)),           # wq
                pl.BlockSpec((1, hidden), lambda b, s, q: (0, 0)),           # bq
                pl.BlockSpec((hidden + pv, C), lambda b, s, q: (0, 0)),      # [wk ; wvz] fused
                pl.BlockSpec((hidden + pv, 1), lambda b, s, q: (0, 0)),      # [bk ; bvz] fused
            ],
            out_specs=[
                pl.BlockSpec((1, C, tq), lambda b, s, q, n=npq: (b, 0, s * n + q)),
                pl.BlockSpec((1, tq, HWp), lambda b, s, q, n=npq: (b, s * n + q, 0)),
            ],
            scratch_shapes=[
                pltpu.VMEM((HWp, hidden), jnp.bfloat16),                     # Q, token-major
                pltpu.VMEM((hidden + pv, HWp), jnp.bfloat16),                # K | V', channel-major
            ],
        ),
        # Batch + q-shard axes are parallel (megacore / v7x 2nd TensorCore); the q-tile
        # axis stays "arbitrary" so every tile of a (batch, shard) sees the scratch
        # written at its q==0 iteration.  vmem_limit_bytes is set per generation.
        compiler_params=pltpu.CompilerParams(
            dimension_semantics=("parallel", "parallel", "arbitrary"),
            vmem_limit_bytes=vmem_limit),
        cost_estimate=pl.CostEstimate(flops=int(flops),
                                      transcendentals=int(B * HWp * HWp),
                                      bytes_accessed=bytes_accessed),
    )(x, wq, bq, w_kvz, b_kvz)

    new_h = out[:, :, :HW].reshape(B, C, H, W)
    return new_h, attn[:, :HW, :HW]


def make_params(key, input_dim, hidden_dim, dtype=jnp.float32):
    """Deterministic synthetic params; weights stored as (in_ch, out_ch)."""
    ks = jax.random.split(key, 8)
    s = 0.1
    return {
        "wq": (s * jax.random.normal(ks[0], (input_dim, hidden_dim))).astype(dtype),
        "bq": (s * jax.random.normal(ks[1], (1, hidden_dim))).astype(dtype),
        "wk": (s * jax.random.normal(ks[2], (input_dim, hidden_dim))).astype(dtype),
        "bk": (s * jax.random.normal(ks[3], (1, hidden_dim))).astype(dtype),
        "wv": (s * jax.random.normal(ks[4], (input_dim, input_dim))).astype(dtype),
        "bv": (s * jax.random.normal(ks[5], (1, input_dim))).astype(dtype),
        "wz": (s * jax.random.normal(ks[6], (input_dim, input_dim))).astype(dtype),
        "bz": (s * jax.random.normal(ks[7], (1, input_dim))).astype(dtype),
    }


def reference(h, params):
    """Pure-JAX reference matching the PyTorch forward (no score scaling, exact softmax)."""
    B, C, H, W = h.shape
    HW = H * W
    x = jnp.transpose(h.reshape(B, C, HW), (0, 2, 1))            # (B, HW, C)
    q = x @ params["wq"] + params["bq"]
    k = x @ params["wk"] + params["bk"]
    v = x @ params["wv"] + params["bv"]
    scores = jnp.einsum("bqh,bkh->bqk", q, k)
    attn = jax.nn.softmax(scores, axis=-1)
    new = jnp.einsum("bqk,bkc->bqc", attn, v)
    out = new @ params["wz"] + params["bz"]
    return jnp.transpose(out, (0, 2, 1)).reshape(B, C, H, W), attn


if __name__ == "__main__":
    key = jax.random.PRNGKey(0)
    k_x, k_p = jax.random.split(key)

    C, hidden_dim = 4, 32
    params = make_params(k_p, C, hidden_dim)

    # Tolerances are loosened vs a pure-f32 kernel because MXU operands are bf16.
    ATOL_A, RTOL_A = 5e-4, 5e-2       # attention weights
    ATOL_H, RTOL_H = 5e-3, 5e-2       # new_h

    # --- Test 1: nominal shape (B=2, 16x16) ----------------------------------
    B, H, W = 2, 16, 16
    h = jax.random.normal(k_x, (B, C, H, W), dtype=jnp.float32)
    new_h, attn = self_attention(h, params)
    jax.block_until_ready((new_h, attn))
    ref_h, ref_attn = reference(h, params)
    assert new_h.shape == (B, C, H, W)
    assert attn.shape == (B, H * W, H * W)
    assert jnp.allclose(attn, ref_attn, atol=ATOL_A, rtol=RTOL_A)
    assert jnp.allclose(new_h, ref_h, atol=ATOL_H, rtol=RTOL_H)

    # --- Test 2: odd batch -> q-shard (v7x two-core) path, multiple q-tiles ---
    k_x2, _ = jax.random.split(k_x)
    h2 = jax.random.normal(k_x2, (1, C, 32, 32), dtype=jnp.float32)
    new_h2, attn2 = self_attention(h2, params, q_tile=256)       # nq=4 -> 2 shards x 2 tiles
    jax.block_until_ready((new_h2, attn2))
    ref_h2, ref_attn2 = reference(h2, params)
    assert jnp.allclose(attn2, ref_attn2, atol=ATOL_A, rtol=RTOL_A)
    assert jnp.allclose(new_h2, ref_h2, atol=ATOL_H, rtol=RTOL_H)

    # --- Test 3: HW not a multiple of 128 (pad + key-mask path) ---------------
    k_x3, _ = jax.random.split(k_x2)
    h3 = jax.random.normal(k_x3, (2, C, 10, 10), dtype=jnp.float32)
    new_h3, attn3 = self_attention(h3, params)
    jax.block_until_ready((new_h3, attn3))
    ref_h3, ref_attn3 = reference(h3, params)
    assert attn3.shape == (2, 100, 100)
    assert jnp.allclose(attn3, ref_attn3, atol=ATOL_A, rtol=RTOL_A)
    assert jnp.allclose(new_h3, ref_h3, atol=ATOL_H, rtol=RTOL_H)

    print("KERNEL_OK")
</pallas_src>

<mosaic_0001>
module attributes {stable_mosaic.version = 11 : i64} {
  func.func @kernel(%arg0: i32, %arg1: i32, %arg2: i32, %arg3: memref<1x4x256xf32, #tpu.memory_space<vmem>>, %arg4: memref<4x32xf32, #tpu.memory_space<vmem>>, %arg5: memref<1x32xf32, #tpu.memory_space<vmem>>, %arg6: memref<40x4xf32, #tpu.memory_space<vmem>>, %arg7: memref<40x1xf32, #tpu.memory_space<vmem>>, %arg8: memref<1x4x256xf32, #tpu.memory_space<vmem>>, %arg9: memref<1x256x256xf32, #tpu.memory_space<vmem>>, %arg10: memref<256x32xbf16, #tpu.memory_space<vmem>>, %arg11: memref<40x256xbf16, #tpu.memory_space<vmem>>) attributes {dimension_semantics = [#tpu.dimension_semantics<parallel>, #tpu.dimension_semantics<parallel>, #tpu.dimension_semantics<arbitrary>], iteration_bounds = array<i64: 2, 1, 1>, scalar_prefetch = 0 : i64, scratch_operands = 2 : i64, tpu.core_type = #tpu.core_type<tc>, window_params = [{transform_indices = @transform_0, window_bounds = array<i64: 1, 4, 256>}, {pipeline_mode = #tpu.pipeline_mode<synchronous>, transform_indices = @transform_1, window_bounds = array<i64: 4, 32>}, {pipeline_mode = #tpu.pipeline_mode<synchronous>, transform_indices = @transform_2, window_bounds = array<i64: 1, 32>}, {pipeline_mode = #tpu.pipeline_mode<synchronous>, transform_indices = @transform_3, window_bounds = array<i64: 40, 4>}, {pipeline_mode = #tpu.pipeline_mode<synchronous>, transform_indices = @transform_4, window_bounds = array<i64: 40, 1>}, {transform_indices = @transform_5, window_bounds = array<i64: 1, 4, 256>}, {transform_indices = @transform_6, window_bounds = array<i64: 1, 256, 256>}]} {
    %c0_i32 = arith.constant 0 : i32
    %0 = arith.cmpi eq, %arg2, %c0_i32 : i32
    %1 = arith.extui %0 : i1 to i32
    %c0_i32_0 = arith.constant 0 : i32
    %2 = arith.cmpi ne, %1, %c0_i32_0 : i32
    scf.if %2 {
      %c0_13 = arith.constant 0 : index
      %c0_14 = arith.constant 0 : index
      %c0_15 = arith.constant 0 : index
      %31 = vector.load %arg3[%c0_13, %c0_14, %c0_15] : memref<1x4x256xf32, #tpu.memory_space<vmem>>, vector<1x4x256xf32>
      %32 = vector.shape_cast %31 : vector<1x4x256xf32> to vector<4x256xf32>
      %c0_16 = arith.constant 0 : index
      %c0_17 = arith.constant 0 : index
      %33 = vector.load %arg4[%c0_16, %c0_17] : memref<4x32xf32, #tpu.memory_space<vmem>>, vector<4x32xf32>
      %cst_18 = arith.constant dense<0.000000e+00> : vector<256x32xf32>
      %34 = tpu.matmul %32, %33, %cst_18 {dimension_numbers = #tpu.dot_dimension_numbers<[0], [0], [1], [1], [0, 1, 1, 1], [], []>} : vector<4x256xf32>, vector<4x32xf32>, vector<256x32xf32> -> vector<256x32xf32>
      %c0_19 = arith.constant 0 : index
      %c0_20 = arith.constant 0 : index
      %35 = vector.load %arg5[%c0_19, %c0_20] : memref<1x32xf32, #tpu.memory_space<vmem>>, vector<1x32xf32>
      %36 = vector.broadcast %35 : vector<1x32xf32> to vector<256x32xf32>
      %37 = arith.addf %34, %36 : vector<256x32xf32>
      %38 = arith.truncf %37 : vector<256x32xf32> to vector<256x32xbf16>
      %c0_21 = arith.constant 0 : index
      %c0_22 = arith.constant 0 : index
      %39 = vector.load %arg10[%c0_21, %c0_22] : memref<256x32xbf16, #tpu.memory_space<vmem>>, vector<256x32xbf16>
      tpu.vector_store %arg10[%c0_21, %c0_22], %38 {strides = array<i32>} : memref<256x32xbf16, #tpu.memory_space<vmem>>, vector<256x32xbf16>,
      %c0_23 = arith.constant 0 : index
      %c0_24 = arith.constant 0 : index
      %40 = vector.load %arg6[%c0_23, %c0_24] : memref<40x4xf32, #tpu.memory_space<vmem>>, vector<40x4xf32>
      %cst_25 = arith.constant dense<0.000000e+00> : vector<40x256xf32>
      %41 = tpu.matmul %40, %32, %cst_25 {dimension_numbers = #tpu.dot_dimension_numbers<[1], [0], [0], [1], [0, 0, 1, 1], [], []>} : vector<40x4xf32>, vector<4x256xf32>, vector<40x256xf32> -> vector<40x256xf32>
      %c0_26 = arith.constant 0 : index
      %c0_27 = arith.constant 0 : index
      %42 = vector.load %arg7[%c0_26, %c0_27] : memref<40x1xf32, #tpu.memory_space<vmem>>, vector<40x1xf32>
      %43 = vector.broadcast %42 : vector<40x1xf32> to vector<40x256xf32>
      %44 = arith.addf %41, %43 : vector<40x256xf32>
      %45 = arith.truncf %44 : vector<40x256xf32> to vector<40x256xbf16>
      %c0_28 = arith.constant 0 : index
      %c0_29 = arith.constant 0 : index
      %46 = vector.load %arg11[%c0_28, %c0_29] : memref<40x256xbf16, #tpu.memory_space<vmem>>, vector<40x256xbf16>
      tpu.vector_store %arg11[%c0_28, %c0_29], %45 {strides = array<i32>} : memref<40x256xbf16, #tpu.memory_space<vmem>>, vector<40x256xbf16>,
    } else {
    }
    %c1_i32 = arith.constant 1 : i32
    %3 = arith.muli %arg1, %c1_i32 : i32
    %4 = arith.addi %3, %arg2 : i32
    %c256_i32 = arith.constant 256 : i32
    %5 = arith.muli %4, %c256_i32 : i32
    %6 = tpu.assume_multiple %5, 256 : i32
    %7 = arith.index_cast %6 : i32 to index
    %c0 = arith.constant 0 : index
    %8 = vector.load %arg10[%7, %c0] : memref<256x32xbf16, #tpu.memory_space<vmem>>, vector<256x32xbf16>
    %c0_1 = arith.constant 0 : index
    %c0_2 = arith.constant 0 : index
    %9 = vector.load %arg11[%c0_1, %c0_2] : memref<40x256xbf16, #tpu.memory_space<vmem>>, vector<32x256xbf16>
    %c32 = arith.constant 32 : index
    %c0_3 = arith.constant 0 : index
    %10 = vector.load %arg11[%c32, %c0_3] : memref<40x256xbf16, #tpu.memory_space<vmem>>, vector<8x256xbf16>
    %cst = arith.constant dense<0.000000e+00> : vector<256x256xf32>
    %11 = tpu.matmul %8, %9, %cst {dimension_numbers = #tpu.dot_dimension_numbers<[1], [0], [0], [1], [0, 0, 1, 1], [], []>} : vector<256x32xbf16>, vector<32x256xbf16>, vector<256x256xf32> -> vector<256x256xf32>
    %cst_4 = arith.constant dense<0xFF800000> : vector<256xf32>
    %12 = vector.multi_reduction <maximumf>, %11, %cst_4 [1] : vector<256x256xf32> to vector<256xf32>
    %13 = vector.shape_cast %12 : vector<256xf32> to vector<256x1xf32>
    %14 = vector.broadcast %13 : vector<256x1xf32> to vector<256x256xf32>
    %15 = arith.subf %11, %14 : vector<256x256xf32>
    %16 = math.exp %15 : vector<256x256xf32>
    %cst_5 = arith.constant dense<0.000000e+00> : vector<256xf32>
    %17 = vector.multi_reduction <add>, %16, %cst_5 [1] : vector<256x256xf32> to vector<256xf32>
    %18 = vector.shape_cast %17 : vector<256xf32> to vector<256x1xf32>
    %19 = tpu.reciprocal %18 {approx = true} : vector<256x1xf32> -> vector<256x1xf32>
    %20 = vector.broadcast %19 : vector<256x1xf32> to vector<256x256xf32>
    %21 = arith.mulf %16, %20 : vector<256x256xf32>
    %22 = arith.truncf %21 : vector<256x256xf32> to vector<256x256xbf16>
    %cst_6 = arith.constant dense<0.000000e+00> : vector<8x256xf32>
    %23 = tpu.matmul %10, %22, %cst_6 {dimension_numbers = #tpu.dot_dimension_numbers<[1], [1], [0], [0], [0, 0, 1, 0], [], []>} : vector<8x256xbf16>, vector<256x256xbf16>, vector<8x256xf32> -> vector<8x256xf32>
    %24 = vector.extract_strided_slice %23 {offsets = [0, 0], sizes = [4, 256], strides = [1, 1]} : vector<8x256xf32> to vector<4x256xf32>
    %c0_7 = arith.constant 0 : index
    %c0_8 = arith.constant 0 : index
    %c0_9 = arith.constant 0 : index
    %25 = vector.load %arg8[%c0_7, %c0_8, %c0_9] : memref<1x4x256xf32, #tpu.memory_space<vmem>>, vector<1x4x256xf32>
    %26 = vector.shape_cast %25 : vector<1x4x256xf32> to vector<4x256xf32>
    %27 = vector.shape_cast %24 : vector<4x256xf32> to vector<1x4x256xf32>
    tpu.vector_store %arg8[%c0_7, %c0_8, %c0_9], %27 {strides = array<i32>} : memref<1x4x256xf32, #tpu.memory_space<vmem>>, vector<1x4x256xf32>,
    %c0_10 = arith.constant 0 : index
    %c0_11 = arith.constant 0 : index
    %c0_12 = arith.constant 0 : index
    %28 = vector.load %arg9[%c0_10, %c0_11, %c0_12] : memref<1x256x256xf32, #tpu.memory_space<vmem>>, vector<1x256x256xf32>
    %29 = vector.shape_cast %28 : vector<1x256x256xf32> to vector<256x256xf32>
    %30 = vector.shape_cast %21 : vector<256x256xf32> to vector<1x256x256xf32>
    tpu.vector_store %arg9[%c0_10, %c0_11, %c0_12], %30 {strides = array<i32>} : memref<1x256x256xf32, #tpu.memory_space<vmem>>, vector<1x256x256xf32>,
    return
  }
  func.func @transform_0(%arg0: i32, %arg1: i32, %arg2: i32) -> (i32, i32, i32) {
    %c0_i32 = arith.constant 0 : i32
    %c0_i32_0 = arith.constant 0 : i32
    %c0_i32_1 = arith.constant 0 : i32
    return %arg0, %c0_i32, %c0_i32_0 : i32, i32, i32
  }
  func.func @transform_1(%arg0: i32, %arg1: i32, %arg2: i32) -> (i32, i32) {
    %c0_i32 = arith.constant 0 : i32
    %c0_i32_0 = arith.constant 0 : i32
    %c0_i32_1 = arith.constant 0 : i32
    return %c0_i32, %c0_i32_0 : i32, i32
  }
  func.func @transform_2(%arg0: i32, %arg1: i32, %arg2: i32) -> (i32, i32) {
    %c0_i32 = arith.constant 0 : i32
    %c0_i32_0 = arith.constant 0 : i32
    %c0_i32_1 = arith.constant 0 : i32
    return %c0_i32, %c0_i32_0 : i32, i32
  }
  func.func @transform_3(%arg0: i32, %arg1: i32, %arg2: i32) -> (i32, i32) {
    %c0_i32 = arith.constant 0 : i32
    %c0_i32_0 = arith.constant 0 : i32
    %c0_i32_1 = arith.constant 0 : i32
    return %c0_i32, %c0_i32_0 : i32, i32
  }
  func.func @transform_4(%arg0: i32, %arg1: i32, %arg2: i32) -> (i32, i32) {
    %c0_i32 = arith.constant 0 : i32
    %c0_i32_0 = arith.constant 0 : i32
    %c0_i32_1 = arith.constant 0 : i32
    return %c0_i32, %c0_i32_0 : i32, i32
  }
  func.func @transform_5(%arg0: i32, %arg1: i32, %arg2: i32) -> (i32, i32, i32) {
    %c1_i32 = arith.constant 1 : i32
    %0 = arith.muli %arg1, %c1_i32 : i32
    %1 = arith.addi %0, %arg2 : i32
    %c0_i32 = arith.constant 0 : i32
    %c0_i32_0 = arith.constant 0 : i32
    return %arg0, %c0_i32, %1 : i32, i32, i32
  }
  func.func @transform_6(%arg0: i32, %arg1: i32, %arg2: i32) -> (i32, i32, i32) {
    %c1_i32 = arith.constant 1 : i32
    %0 = arith.muli %arg1, %c1_i32 : i32
    %1 = arith.addi %0, %arg2 : i32
    %c0_i32 = arith.constant 0 : i32
    %c0_i32_0 = arith.constant 0 : i32
    return %arg0, %1, %c0_i32 : i32, i32, i32
  }
}

</mosaic_0001>

<llo_original>
// kernel: tpu_custom_call.1
$region0: #{tpu_custom_call.1}
  #allocation0 [shape = 'u32[]', space=smem, size = 0x4, offset = 0x4, fixed_abs, tag = 'smem constant byte address 0x4 - core index']
  #allocation1 [shape = 'u32[144,128]{1,0:T(1,128)}', space=vmem, size = 0x12000, scoped, tag = 'internal scratch']
  #allocation2 [shape = 'bf16[256,32]{1,0:T(16,128)(2,1)}', space=vmem, size = 0x10000, scoped, tag = 'scratch operand']
  #allocation3 [shape = 'bf16[40,256]{1,0:T(8,128)(2,1)}', space=vmem, size = 0x5000, scoped, tag = 'scratch operand']
  %s0 = inlined_call_operand.vmem [shape: f32[2,4,256], index: 0, kind: input, shape index: {}]
  %s1 = inlined_call_operand.vmem [shape: f32[4,32], index: 1, kind: input, shape index: {}]
  %s2 = inlined_call_operand.vmem [shape: f32[1,32], index: 2, kind: input, shape index: {}]
  %s3 = inlined_call_operand.vmem [shape: f32[40,4], index: 3, kind: input, shape index: {}]
  %s4 = inlined_call_operand.vmem [shape: f32[40,1], index: 4, kind: input, shape index: {}]
  %s5 = inlined_call_operand.hbm [shape: f32[2,4,256], index: 5, kind: output, shape index: {0}]
  %s6 = inlined_call_operand.hbm [shape: f32[2,256,256], index: 6, kind: output, shape index: {1}]
  %7 = xla_tuple %s5, %s6
  %s8 = sld [smem:[#allocation0]]
  $region65: #{tpu_custom_call.1} parent=0
    _
  %s10 = ssub.s32 1, %s8
  %s11 = scalar_select 0, %s10, %s8
  $region1: #{tpu_custom_call.1} parent=0
    #allocation4 [shape = 'u8[8192]{0}', space=vmem, size = 0x2000, scoped, tag = 'output window, operand 0']
    #allocation5 [shape = 's32[2]{0}', space=sflag, size = 0x8, scoped, tag = 'scoped memory for tpu_custom_call.1']
    #allocation6 [shape = 'u8[524288]{0}', space=vmem, size = 0x80000, scoped, tag = 'output window, operand 1']
    #allocation7 [shape = 's32[2]{0}', space=sflag, size = 0x8, scoped, tag = 'scoped memory for tpu_custom_call.1']
    %12 = vsyncpa [#allocation5], 0
    %s13 = scalar_lea.sflag [#allocation5], 1
    %14 = vsyncpa %s13, 0
    %15 = vsyncpa [#allocation7], 0
    %s16 = scalar_lea.sflag [#allocation7], 1
    %17 = vsyncpa %s16, 0
    loop: start=0, step=1, limit=4
    $region2: #{tpu_custom_call.1} parent=1 // loop_pre_header
      _
    $region3: #{tpu_custom_call.1} parent=1 // loop_header
      %s19 = sphi 0, %s23
      %p20 = scmp.ge.s32.totalorder %s19, 4
      %s26 = sphi 0, %s45
      %s27 = sphi 0, %s41
      %s28 = sphi 0, %s37
      %s29 = sphi 0, %s26
      %s30 = sphi 0, %s27
      %s31 = sphi 0, %s28
      %s32 = sphi 0, %s29
      %s33 = sphi 0, %s30
      %s34 = sphi 0, %s31
      %s48 = sphi 0, %s50
      %s51 = sphi 0, %s48
      %s52 = sphi 0, %s51
      %s68 = sphi 0, %s52
      %s72 = sphi 0, %s72
      %s74 = sphi 0, %s72
      %s75 = sphi 0, %s74
      %s89 = sphi 0, %s75
      %s93 = sphi 0, %s93
      %s95 = sphi 0, %s93
      %s96 = sphi 0, %s95
      %s110 = sphi 0, %s96
      %s114 = sphi 0, %s114
      %s116 = sphi 0, %s114
      %s117 = sphi 0, %s116
      %s131 = sphi 0, %s117
      %s135 = sphi 0, %s135
      %s137 = sphi 0, %s135
      %s138 = sphi 0, %s137
      %s152 = sphi 0, %s138
      %s162 = sphi 0, %s164
      %s165 = sphi 0, %s162
      %s166 = sphi 0, %s165
      %s182 = sphi 0, %s166
      %s192 = sphi 0, %s194
      %s195 = sphi 0, %s192
      %s196 = sphi 0, %s195
      %s212 = sphi 0, %s196
    $region4: #{tpu_custom_call.1} parent=1 // loop_header_branch
      %22 = sbr.rel (%p20) target = $region8
    $region5: #{tpu_custom_call.1} parent=1 // loop_body
      %s24 = ssub.s32 %s19, 1
      %s25 = ssub.s32 %s19, 2
      %s35 = sadd.s32 1, %s28
      %p36 = scmp.ge.s32.totalorder %s35, 1
      %s37 = scalar_select %p36, 0, %s35
      %s38 = sadd.s32 1, %s27
      %s39 = scalar_select %p36, %s38, %s27
      %p40 = scmp.ge.s32.totalorder %s39, 1
      %s41 = scalar_select %p40, 0, %s39
      %s42 = sadd.s32 1, %s26
      %s43 = scalar_select %p40, %s42, %s26
      %p44 = scmp.ge.s32.totalorder %s43, 2
      %s45 = scalar_select %p44, 0, %s43
      %s46 = ssub.s32 %s26, %s45
      %p47 = scmp.eq.s32.totalorder %s46, 0
      %s49 = sadd.s32 %s48, 1
      %s50 = scalar_select %p47, %s48, %s49
      %p53 = pneg %p47
      %p54 = scmp.eq.s32.totalorder %s19, 1
      %p55 = por %p53, %p54
      %p56 = scmp.ne.s32.totalorder %s48, %s51
      %p57 = scmp.eq.s32.totalorder %s19, 0
      %p58 = por %p56, %p57
      %p59 = scmp.ne.s32.totalorder %s48, %s51
      %p60 = scmp.eq.s32.totalorder %s24, 1
      %p61 = por %p59, %p60
      %p62 = scmp.ne.s32.totalorder %s51, %s52
      %p63 = scmp.eq.s32.totalorder %s24, 0
      %p64 = por %p62, %p63
      %p65 = scmp.ne.s32.totalorder %s51, %s52
      %p66 = scmp.eq.s32.totalorder %s25, 1
      %p67 = por %p65, %p66
      %p69 = scmp.ne.s32.totalorder %s52, %s68
      %p70 = scmp.eq.s32.totalorder %s25, 0
      %p71 = por %p69, %p70
      %s73 = sadd.s32 %s72, 1
      %p76 = scmp.eq.s32.totalorder %s19, 1
      %p77 = scmp.ne.s32.totalorder %s72, %s74
      %p78 = scmp.eq.s32.totalorder %s19, 0
      %p79 = por %p77, %p78
      %p80 = scmp.ne.s32.totalorder %s72, %s74
      %p81 = scmp.eq.s32.totalorder %s24, 1
      %p82 = por %p80, %p81
      %p83 = scmp.ne.s32.totalorder %s74, %s75
      %p84 = scmp.eq.s32.totalorder %s24, 0
      %p85 = por %p83, %p84
      %p86 = scmp.ne.s32.totalorder %s74, %s75
      %p87 = scmp.eq.s32.totalorder %s25, 1
      %p88 = por %p86, %p87
      %p90 = scmp.ne.s32.totalorder %s75, %s89
      %p91 = scmp.eq.s32.totalorder %s25, 0
      %p92 = por %p90, %p91
      %s94 = sadd.s32 %s93, 1
      %p97 = scmp.eq.s32.totalorder %s19, 1
      %p98 = scmp.ne.s32.totalorder %s93, %s95
      %p99 = scmp.eq.s32.totalorder %s19, 0
      %p100 = por %p98, %p99
      %p101 = scmp.ne.s32.totalorder %s93, %s95
      %p102 = scmp.eq.s32.totalorder %s24, 1
      %p103 = por %p101, %p102
      %p104 = scmp.ne.s32.totalorder %s95, %s96
      %p105 = scmp.eq.s32.totalorder %s24, 0
      %p106 = por %p104, %p105
      %p107 = scmp.ne.s32.totalorder %s95, %s96
      %p108 = scmp.eq.s32.totalorder %s25, 1
      %p109 = por %p107, %p108
      %p111 = scmp.ne.s32.totalorder %s96, %s110
      %p112 = scmp.eq.s32.totalorder %s25, 0
      %p113 = por %p111, %p112
      %s115 = sadd.s32 %s114, 1
      %p118 = scmp.eq.s32.totalorder %s19, 1
      %p119 = scmp.ne.s32.totalorder %s114, %s116
      %p120 = scmp.eq.s32.totalorder %s19, 0
      %p121 = por %p119, %p120
      %p122 = scmp.ne.s32.totalorder %s114, %s116
      %p123 = scmp.eq.s32.totalorder %s24, 1
      %p124 = por %p122, %p123
      %p125 = scmp.ne.s32.totalorder %s116, %s117
      %p126 = scmp.eq.s32.totalorder %s24, 0
      %p127 = por %p125, %p126
      %p128 = scmp.ne.s32.totalorder %s116, %s117
      %p129 = scmp.eq.s32.totalorder %s25, 1
      %p130 = por %p128, %p129
      %p132 = scmp.ne.s32.totalorder %s117, %s131
      %p133 = scmp.eq.s32.totalorder %s25, 0
      %p134 = por %p132, %p133
      %s136 = sadd.s32 %s135, 1
      %p139 = scmp.eq.s32.totalorder %s19, 1
      %p140 = scmp.ne.s32.totalorder %s135, %s137
      %p141 = scmp.eq.s32.totalorder %s19, 0
      %p142 = por %p140, %p141
      %p143 = scmp.ne.s32.totalorder %s135, %s137
      %p144 = scmp.eq.s32.totalorder %s24, 1
      %p145 = por %p143, %p144
      %p146 = scmp.ne.s32.totalorder %s137, %s138
      %p147 = scmp.eq.s32.totalorder %s24, 0
      %p148 = por %p146, %p147
      %p149 = scmp.ne.s32.totalorder %s137, %s138
      %p150 = scmp.eq.s32.totalorder %s25, 1
      %p151 = por %p149, %p150
      %p153 = scmp.ne.s32.totalorder %s138, %s152
      %p154 = scmp.eq.s32.totalorder %s25, 0
      %p155 = por %p153, %p154
      %s156 = sadd.s32 %s27, %s28
      %s157 = sadd.s32 %s41, %s37
      %s158 = ssub.s32 %s26, %s45
      %s159 = ssub.s32 %s156, %s157
      %s160 = sor.u32 %s158, %s159
      %p161 = scmp.eq.s32.totalorder %s160, 0
      %s163 = sadd.s32 %s162, 1
      %s164 = scalar_select %p161, %s162, %s163
      %p167 = pneg %p161
      %p168 = scmp.eq.s32.totalorder %s19, 1
      %p169 = por %p167, %p168
      %p170 = scmp.ne.s32.totalorder %s162, %s165
      %p171 = scmp.eq.s32.totalorder %s19, 0
      %p172 = por %p170, %p171
      %p173 = scmp.ne.s32.totalorder %s162, %s165
      %p174 = scmp.eq.s32.totalorder %s24, 1
      %p175 = por %p173, %p174
      %p176 = scmp.ne.s32.totalorder %s165, %s166
      %p177 = scmp.eq.s32.totalorder %s24, 0
      %p178 = por %p176, %p177
      %p179 = scmp.ne.s32.totalorder %s165, %s166
      %p180 = scmp.eq.s32.totalorder %s25, 1
      %p181 = por %p179, %p180
      %p183 = scmp.ne.s32.totalorder %s166, %s182
      %p184 = scmp.eq.s32.totalorder %s25, 0
      %p185 = por %p183, %p184
      %s186 = sadd.s32 %s27, %s28
      %s187 = sadd.s32 %s41, %s37
      %s188 = ssub.s32 %s26, %s45
      %s189 = ssub.s32 %s186, %s187
      %s190 = sor.u32 %s188, %s189
      %p191 = scmp.eq.s32.totalorder %s190, 0
      %s193 = sadd.s32 %s192, 1
      %s194 = scalar_select %p191, %s192, %s193
      %p197 = pneg %p191
      %p198 = scmp.eq.s32.totalorder %s19, 1
      %p199 = por %p197, %p198
      %p200 = scmp.ne.s32.totalorder %s192, %s195
      %p201 = scmp.eq.s32.totalorder %s19, 0
      %p202 = por %p200, %p201
      %p203 = scmp.ne.s32.totalorder %s192, %s195
      %p204 = scmp.eq.s32.totalorder %s24, 1
      %p205 = por %p203, %p204
      %p206 = scmp.ne.s32.totalorder %s195, %s196
      %p207 = scmp.eq.s32.totalorder %s24, 0
      %p208 = por %p206, %p207
      %p209 = scmp.ne.s32.totalorder %s195, %s196
      %p210 = scmp.eq.s32.totalorder %s25, 1
      %p211 = por %p209, %p210
      %p213 = scmp.ne.s32.totalorder %s196, %s212
      %p214 = scmp.eq.s32.totalorder %s25, 0
      %p215 = por %p213, %p214
      %p216 = scmp.le.s32.totalorder 1, %s19
      %p217 = scmp.lt.s32.totalorder %s19, 3
      %p218 = pnand %p216, %p217
      %p219 = pneg %p218
      // Predicated region
      $region9: #{tpu_custom_call.1} parent=5 // pred_check
        _
      $region10: #{tpu_custom_call.1} parent=5 // pred_check_branch
        %221 = sbr.rel (%p218) target = $region12
      $region11: #{tpu_custom_call.1} parent=5 // pred_region
        %s222 = ssub.s32 %s19, 1
        // Predicated region
        $region13: #{tpu_custom_call.1} parent=11 // pred_check
          %p223 = pneg %p85
        $region14: #{tpu_custom_call.1} parent=11 // pred_check_branch
          %225 = sbr.rel (%p223) target = $region16
        $region15: #{tpu_custom_call.1} parent=11 // pred_region
          _
        $region16: #{tpu_custom_call.1} parent=11 // pred_fallthru
          _
        // Predicated region
        $region17: #{tpu_custom_call.1} parent=11 // pred_check
          %p226 = pneg %p106
        $region18: #{tpu_custom_call.1} parent=11 // pred_check_branch
          %228 = sbr.rel (%p226) target = $region20
        $region19: #{tpu_custom_call.1} parent=11 // pred_region
          _
        $region20: #{tpu_custom_call.1} parent=11 // pred_fallthru
          _
        // Predicated region
        $region21: #{tpu_custom_call.1} parent=11 // pred_check
          %p229 = pneg %p127
        $region22: #{tpu_custom_call.1} parent=11 // pred_check_branch
          %231 = sbr.rel (%p229) target = $region24
        $region23: #{tpu_custom_call.1} parent=11 // pred_region
          _
        $region24: #{tpu_custom_call.1} parent=11 // pred_fallthru
          _
        // Predicated region
        $region25: #{tpu_custom_call.1} parent=11 // pred_check
          %p232 = pneg %p148
        $region26: #{tpu_custom_call.1} parent=11 // pred_check_branch
          %234 = sbr.rel (%p232) target = $region28
        $region27: #{tpu_custom_call.1} parent=11 // pred_region
          _
        $region28: #{tpu_custom_call.1} parent=11 // pred_fallthru
          _
      $region12: #{tpu_custom_call.1} parent=5 // pred_fallthru
        _
      %p235 = scmp.lt.s32.totalorder %s19, 2
      // Predicated region
      $region29: #{tpu_custom_call.1} parent=5 // pred_check
        %p236 = pneg %p235
      $region30: #{tpu_custom_call.1} parent=5 // pred_check_branch
        %238 = sbr.rel (%p236) target = $region32
      $region31: #{tpu_custom_call.1} parent=5 // pred_region
        // Predicated region
        $region33: #{tpu_custom_call.1} parent=31 // pred_check
          %p239 = pneg %p58
        $region34: #{tpu_custom_call.1} parent=31 // pred_check_branch
          %241 = sbr.rel (%p239) target = $region36
        $region35: #{tpu_custom_call.1} parent=31 // pred_region
          %p242 = scmp.lt.s32.totalorder %s26, 1
          %s243 = scalar_select %p242, %s26, 1
          %s244 = smul.addr %s243, 2
          %s245 = smul.addr %s244, 4
          %s246 = scalar_lea.vmem %s0, %s245
        $region36: #{tpu_custom_call.1} parent=31 // pred_fallthru
          _
      $region32: #{tpu_custom_call.1} parent=5 // pred_fallthru
        _
      %p247 = scmp.le.s32.totalorder 1, %s19
      %p248 = scmp.lt.s32.totalorder %s19, 3
      %p249 = pnand %p247, %p248
      %p250 = pneg %p249
      // Predicated region
      $region37: #{tpu_custom_call.1} parent=5 // pred_check
        _
      $region38: #{tpu_custom_call.1} parent=5 // pred_check_branch
        %252 = sbr.rel (%p249) target = $region40
      $region39: #{tpu_custom_call.1} parent=5 // pred_region
        %s253 = ssub.s32 %s19, 1
        %p254 = scmp.lt.s32.totalorder %s29, 1
        %s255 = scalar_select %p254, %s29, 1
        %s256 = smul.addr %s255, 2
        %s257 = smul.addr %s256, 4
        %s258 = scalar_lea.vmem %s0, %s257
        %p259 = pneg %p64
        %p260 = pneg %p61
        %p261 = pneg %p85
        %p262 = pneg %p82
        %p263 = pneg %p106
        %p264 = pneg %p103
        %p265 = pneg %p127
        %p266 = pneg %p124
        %p267 = pneg %p148
        %p268 = pneg %p145
        %p269 = pneg %p178
        %p270 = pneg %p175
        %s271 = sand.u32 %s165, 1
        %s272 = scalar_lea.sflag [#allocation5], %s271
        %s273 = sand.u32 %s165, 1
        %s274 = smul.addr %s273, 8
        %s275 = scalar_lea.vmem [#allocation4], %s274
        %p276 = pneg %p208
        %p277 = pneg %p205
        %s278 = sand.u32 %s195, 1
        %s279 = scalar_lea.sflag [#allocation7], %s278
        %s280 = sand.u32 %s195, 1
        %s281 = smul.addr %s280, 512
        %s282 = scalar_lea.vmem [#allocation6], %s281
        %p283 = scmp.lt.s32.totalorder %s29, 1
        %s284 = scalar_select %p283, %s29, 1
        %s285 = smul.addr %s284, 2
        %s286 = smul.addr %s285, 4
        %s287 = scalar_lea.vmem %s0, %s286
        %s288 = sadd.s32 %s30, %s31
        %s289 = smul.u32 2, %s288
        %s290 = sadd.s32 %s30, %s31
        %s291 = smul.u32 32, %s290
        %p293 = scmp.eq.s32.totalorder %s31, 0
        // Predicated region
        $region41: #{tpu_custom_call.1} parent=39 // pred_check
          %p294 = pneg %p293
        $region42: #{tpu_custom_call.1} parent=39 // pred_check_branch
          %296 = sbr.rel (%p294) target = $region44
        $region43: #{tpu_custom_call.1} parent=39 // pred_region
          %v297 = vld [vmem:[%s287] sm:$0xff]
          %v298 = vld [vmem:[%s1] sm:$0xf]
          %v299 = vld [vmem:[%s2] sm:$0x1]
          %v301 = vlaneseq
          %v302 = vshrl.u32 %v301, 7
          %v303 = vsub.s32 0, %v302
          %v304 = vrot.slane %v299, %v303
          %v307 = vcombine.high %v297, %v297
          %309 = vxpose.xlu0.b32.start [1/16] %v297, 128
          %310 = vxpose.xlu0.b32.cont [2/16] 0.0, 128
          %311 = vxpose.xlu0.b32.cont [3/16] 0.0, 128
          %312 = vxpose.xlu0.b32.cont [4/16] 0.0, 128
          %313 = vxpose.xlu0.b32.cont [5/16] 0.0, 128
          %314 = vxpose.xlu0.b32.cont [6/16] 0.0, 128
          %315 = vxpose.xlu0.b32.cont [7/16] 0.0, 128
          %316 = vxpose.xlu0.b32.cont [8/16] 0.0, 128
          %317 = vxpose.xlu0.b32.cont [9/16] 0.0, 128
          %318 = vxpose.xlu0.b32.cont [10/16] 0.0, 128
          %319 = vxpose.xlu0.b32.cont [11/16] 0.0, 128
          %320 = vxpose.xlu0.b32.cont [12/16] 0.0, 128
          %321 = vxpose.xlu0.b32.cont [13/16] 0.0, 128
          %322 = vxpose.xlu0.b32.cont [14/16] 0.0, 128
          %323 = vxpose.xlu0.b32.cont [15/16] 0.0, 128
          %324 = vxpose.xlu0.b32.end [16/16] 0.0, 128
          %v325 = vpop.trf.xlu0
          %v326 = vpop.trf.xlu0
          %v327 = vpop.trf.xlu0
          %v328 = vpop.trf.xlu0
          %v329 = vpop.trf.xlu0
          %v330 = vpop.trf.xlu0
          %v331 = vpop.trf.xlu0
          %v332 = vpop.trf.xlu0
          %v333 = vpop.trf.xlu0
          %v334 = vpop.trf.xlu0
          %v335 = vpop.trf.xlu0
          %v336 = vpop.trf.xlu0
          %v337 = vpop.trf.xlu0
          %v338 = vpop.trf.xlu0
          %v339 = vpop.trf.xlu0
          %v340 = vpop.trf.xlu0
          %341 = vxpose.xlu0.b32.start [1/16] %v307, 128
          %342 = vxpose.xlu0.b32.cont [2/16] 0.0, 128
          %343 = vxpose.xlu0.b32.cont [3/16] 0.0, 128
          %344 = vxpose.xlu0.b32.cont [4/16] 0.0, 128
          %345 = vxpose.xlu0.b32.cont [5/16] 0.0, 128
          %346 = vxpose.xlu0.b32.cont [6/16] 0.0, 128
          %347 = vxpose.xlu0.b32.cont [7/16] 0.0, 128
          %348 = vxpose.xlu0.b32.cont [8/16] 0.0, 128
          %349 = vxpose.xlu0.b32.cont [9/16] 0.0, 128
          %350 = vxpose.xlu0.b32.cont [10/16] 0.0, 128
          %351 = vxpose.xlu0.b32.cont [11/16] 0.0, 128
          %352 = vxpose.xlu0.b32.cont [12/16] 0.0, 128
          %353 = vxpose.xlu0.b32.cont [13/16] 0.0, 128
          %354 = vxpose.xlu0.b32.cont [14/16] 0.0, 128
          %355 = vxpose.xlu0.b32.cont [15/16] 0.0, 128
          %356 = vxpose.xlu0.b32.end [16/16] 0.0, 128
          %v357 = vpop.trf.xlu0
          %v358 = vpop.trf.xlu0
          %v359 = vpop.trf.xlu0
          %v360 = vpop.trf.xlu0
          %v361 = vpop.trf.xlu0
          %v362 = vpop.trf.xlu0
          %v363 = vpop.trf.xlu0
          %v364 = vpop.trf.xlu0
          %v365 = vpop.trf.xlu0
          %v366 = vpop.trf.xlu0
          %v367 = vpop.trf.xlu0
          %v368 = vpop.trf.xlu0
          %v369 = vpop.trf.xlu0
          %v370 = vpop.trf.xlu0
          %v371 = vpop.trf.xlu0
          %v372 = vpop.trf.xlu0
          %vm373 = vcmask 31744
          %v375 = vsel %vm373, %v325, 0
          %v378 = vsel %vm373, %v326, 0
          %v381 = vsel %vm373, %v327, 0
          %v384 = vsel %vm373, %v328, 0
          %v387 = vsel %vm373, %v329, 0
          %v390 = vsel %vm373, %v330, 0
          %v393 = vsel %vm373, %v331, 0
          %v396 = vsel %vm373, %v332, 0
          %v399 = vsel %vm373, %v333, 0
          %v402 = vsel %vm373, %v334, 0
          %v405 = vsel %vm373, %v335, 0
          %v408 = vsel %vm373, %v336, 0
          %v411 = vsel %vm373, %v337, 0
          %v414 = vsel %vm373, %v338, 0
          %v417 = vsel %vm373, %v339, 0
          %v420 = vsel %vm373, %v340, 0
          %v423 = vsel %vm373, %v357, 0
          %v426 = vsel %vm373, %v358, 0
          %v429 = vsel %vm373, %v359, 0
          %v432 = vsel %vm373, %v360, 0
          %v435 = vsel %vm373, %v361, 0
          %v438 = vsel %vm373, %v362, 0
          %v441 = vsel %vm373, %v363, 0
          %v444 = vsel %vm373, %v364, 0
          %v447 = vsel %vm373, %v365, 0
          %v450 = vsel %vm373, %v366, 0
          %v453 = vsel %vm373, %v367, 0
          %v456 = vsel %vm373, %v368, 0
          %v459 = vsel %vm373, %v369, 0
          %v462 = vsel %vm373, %v370, 0
          %v465 = vsel %vm373, %v371, 0
          %v468 = vsel %vm373, %v372, 0
          %vm470 = vcmask 1043456
          %v472 = vsel %vm470, %v298, 0
          %474 = vmatprep.subr.mxu0 0.0
          %475 = vmatpush1.msra.mxu0 %v472
          %476 = vmatprep.subr.mxu0 0.0
          %477 = vmatpush1.msra.mxu0 0.0
          %478 = vmatprep.subr.mxu0 0.0
          %479 = vmatpush1.msra.mxu0 0.0
          %480 = vmatprep.subr.mxu0 0.0
          %481 = vmatpush1.msra.mxu0 0.0
          %482 = vmatprep.subr.mxu0 0.0
          %483 = vmatpush1.msra.mxu0 0.0
          %484 = vmatprep.subr.mxu0 0.0
          %485 = vmatpush1.msra.mxu0 0.0
          %486 = vmatprep.subr.mxu0 0.0
          %487 = vmatpush1.msra.mxu0 0.0
          %488 = vmatprep.subr.mxu0 0.0
          %489 = vmatpush1.msra.mxu0 0.0
          %490 = vmatprep.subr.mxu0 0.0
          %491 = vmatpush1.msra.mxu0 0.0
          %492 = vmatprep.subr.mxu0 0.0
          %493 = vmatpush1.msra.mxu0 0.0
          %494 = vmatprep.subr.mxu0 0.0
          %495 = vmatpush1.msra.mxu0 0.0
          %496 = vmatprep.subr.mxu0 0.0
          %497 = vmatpush1.msra.mxu0 0.0
          %498 = vmatprep.subr.mxu0 0.0
          %499 = vmatpush1.msra.mxu0 0.0
          %500 = vmatprep.subr.mxu0 0.0
          %501 = vmatpush1.msra.mxu0 0.0
          %502 = vmatprep.subr.mxu0 0.0
          %503 = vmatpush1.msra.mxu0 0.0
          %504 = vmatprep.subr.mxu0 0.0
          %505 = vmatpush1.msra.mxu0 0.0
          %506 = vmatprep.subr.mxu0 0.0
          %507 = vmatpush1.msra.mxu0 0.0
          %508 = vmatprep.subr.mxu0 0.0
          %509 = vmatpush1.msra.mxu0 0.0
          %510 = vmatprep.subr.mxu0 0.0
          %511 = vmatpush1.msra.mxu0 0.0
          %512 = vmatprep.subr.mxu0 0.0
          %513 = vmatpush1.msra.mxu0 0.0
          %514 = vmatprep.subr.mxu0 0.0
          %515 = vmatpush1.msra.mxu0 0.0
          %516 = vmatprep.subr.mxu0 0.0
          %517 = vmatpush1.msra.mxu0 0.0
          %518 = vmatprep.subr.mxu0 0.0
          %519 = vmatpush1.msra.mxu0 0.0
          %520 = vmatprep.subr.mxu0 0.0
          %521 = vmatpush1.msra.mxu0 0.0
          %522 = vmatprep.subr.mxu0 0.0
          %523 = vmatpush1.msra.mxu0 0.0
          %524 = vmatprep.subr.mxu0 0.0
          %525 = vmatpush1.msra.mxu0 0.0
          %526 = vmatprep.subr.mxu0 0.0
          %527 = vmatpush1.msra.mxu0 0.0
          %528 = vmatprep.subr.mxu0 0.0
          %529 = vmatpush1.msra.mxu0 0.0
          %530 = vmatprep.subr.mxu0 0.0
          %531 = vmatpush1.msra.mxu0 0.0
          %532 = vmatprep.subr.mxu0 0.0
          %533 = vmatpush1.msra.mxu0 0.0
          %534 = vmatprep.subr.mxu0 0.0
          %535 = vmatpush1.msra.mxu0 0.0
          %536 = vmatprep.subr.mxu0 0.0
          %537 = vmatpush1.msra.mxu0 0.0
          %538 = vmatprep.mubr.f32.mxu0 0.0
          %539 = vmatmul.mubr.f32.gmra.mrb[0].mxu0 %v375
          %v540 = vpop.f32.mrb[0].mxu0
          %v541 = vadd.f32 %v304, %v540
          %v542 = vpop.f32.mrb[0].mxu0
          %543 = vmatprep.mubr.f32.mxu0 0.0
          %544 = vmatmul.mubr.f32.gmra.mrb[0].mxu0 %v378
          %v545 = vpop.f32.mrb[0].mxu0
          %v546 = vadd.f32 %v304, %v545
          %v547 = vpop.f32.mrb[0].mxu0
          %548 = vmatprep.mubr.f32.mxu0 0.0
          %549 = vmatmul.mubr.f32.gmra.mrb[0].mxu0 %v381
          %v550 = vpop.f32.mrb[0].mxu0
          %v551 = vadd.f32 %v304, %v550
          %v552 = vpop.f32.mrb[0].mxu0
          %553 = vmatprep.mubr.f32.mxu0 0.0
          %554 = vmatmul.mubr.f32.gmra.mrb[0].mxu0 %v384
          %v555 = vpop.f32.mrb[0].mxu0
          %v556 = vadd.f32 %v304, %v555
          %v557 = vpop.f32.mrb[0].mxu0
          %558 = vmatprep.mubr.f32.mxu0 0.0
          %559 = vmatmul.mubr.f32.gmra.mrb[0].mxu0 %v387
          %v560 = vpop.f32.mrb[0].mxu0
          %v561 = vadd.f32 %v304, %v560
          %v562 = vpop.f32.mrb[0].mxu0
          %563 = vmatprep.mubr.f32.mxu0 0.0
          %564 = vmatmul.mubr.f32.gmra.mrb[0].mxu0 %v390
          %v565 = vpop.f32.mrb[0].mxu0
          %v566 = vadd.f32 %v304, %v565
          %v567 = vpop.f32.mrb[0].mxu0
          %568 = vmatprep.mubr.f32.mxu0 0.0
          %569 = vmatmul.mubr.f32.gmra.mrb[0].mxu0 %v393
          %v570 = vpop.f32.mrb[0].mxu0
          %v571 = vadd.f32 %v304, %v570
          %v572 = vpop.f32.mrb[0].mxu0
          %573 = vmatprep.mubr.f32.mxu0 0.0
          %574 = vmatmul.mubr.f32.gmra.mrb[0].mxu0 %v396
          %v575 = vpop.f32.mrb[0].mxu0
          %v576 = vadd.f32 %v304, %v575
          %v577 = vpop.f32.mrb[0].mxu0
          %578 = vmatprep.mubr.f32.mxu0 0.0
          %579 = vmatmul.mubr.f32.gmra.mrb[0].mxu0 %v399
          %v580 = vpop.f32.mrb[0].mxu0
          %v581 = vadd.f32 %v304, %v580
          %v582 = vpop.f32.mrb[0].mxu0
          %583 = vmatprep.mubr.f32.mxu0 0.0
          %584 = vmatmul.mubr.f32.gmra.mrb[0].mxu0 %v402
          %v585 = vpop.f32.mrb[0].mxu0
          %v586 = vadd.f32 %v304, %v585
          %v587 = vpop.f32.mrb[0].mxu0
          %588 = vmatprep.mubr.f32.mxu0 0.0
          %589 = vmatmul.mubr.f32.gmra.mrb[0].mxu0 %v405
          %v590 = vpop.f32.mrb[0].mxu0
          %v591 = vadd.f32 %v304, %v590
          %v592 = vpop.f32.mrb[0].mxu0
          %593 = vmatprep.mubr.f32.mxu0 0.0
          %594 = vmatmul.mubr.f32.gmra.mrb[0].mxu0 %v408
          %v595 = vpop.f32.mrb[0].mxu0
          %v596 = vadd.f32 %v304, %v595
          %v597 = vpop.f32.mrb[0].mxu0
          %598 = vmatprep.mubr.f32.mxu0 0.0
          %599 = vmatmul.mubr.f32.gmra.mrb[0].mxu0 %v411
          %v600 = vpop.f32.mrb[0].mxu0
          %v601 = vadd.f32 %v304, %v600
          %v602 = vpop.f32.mrb[0].mxu0
          %603 = vmatprep.mubr.f32.mxu0 0.0
          %604 = vmatmul.mubr.f32.gmra.mrb[0].mxu0 %v414
          %v605 = vpop.f32.mrb[0].mxu0
          %v606 = vadd.f32 %v304, %v605
          %v607 = vpop.f32.mrb[0].mxu0
          %608 = vmatprep.mubr.f32.mxu0 0.0
          %609 = vmatmul.mubr.f32.gmra.mrb[0].mxu0 %v417
          %v610 = vpop.f32.mrb[0].mxu0
          %v611 = vadd.f32 %v304, %v610
          %v612 = vpop.f32.mrb[0].mxu0
          %613 = vmatprep.mubr.f32.mxu0 0.0
          %614 = vmatmul.mubr.f32.gmra.mrb[0].mxu0 %v420
          %v615 = vpop.f32.mrb[0].mxu0
          %v616 = vadd.f32 %v304, %v615
          %v617 = vpop.f32.mrb[0].mxu0
          %618 = vmatprep.mubr.f32.mxu0 0.0
          %619 = vmatmul.mubr.f32.gmra.mrb[0].mxu0 %v423
          %v620 = vpop.f32.mrb[0].mxu0
          %v621 = vadd.f32 %v304, %v620
          %v622 = vpop.f32.mrb[0].mxu0
          %623 = vmatprep.mubr.f32.mxu0 0.0
          %624 = vmatmul.mubr.f32.gmra.mrb[0].mxu0 %v426
          %v625 = vpop.f32.mrb[0].mxu0
          %v626 = vadd.f32 %v304, %v625
          %v627 = vpop.f32.mrb[0].mxu0
          %628 = vmatprep.mubr.f32.mxu0 0.0
          %629 = vmatmul.mubr.f32.gmra.mrb[0].mxu0 %v429
          %v630 = vpop.f32.mrb[0].mxu0
          %v631 = vadd.f32 %v304, %v630
          %v632 = vpop.f32.mrb[0].mxu0
          %633 = vmatprep.mubr.f32.mxu0 0.0
          %634 = vmatmul.mubr.f32.gmra.mrb[0].mxu0 %v432
          %v635 = vpop.f32.mrb[0].mxu0
          %v636 = vadd.f32 %v304, %v635
          %v637 = vpop.f32.mrb[0].mxu0
          %638 = vmatprep.mubr.f32.mxu0 0.0
          %639 = vmatmul.mubr.f32.gmra.mrb[0].mxu0 %v435
          %v640 = vpop.f32.mrb[0].mxu0
          %v641 = vadd.f32 %v304, %v640
          %v642 = vpop.f32.mrb[0].mxu0
          %643 = vmatprep.mubr.f32.mxu0 0.0
          %644 = vmatmul.mubr.f32.gmra.mrb[0].mxu0 %v438
          %v645 = vpop.f32.mrb[0].mxu0
          %v646 = vadd.f32 %v304, %v645
          %v647 = vpop.f32.mrb[0].mxu0
          %648 = vmatprep.mubr.f32.mxu0 0.0
          %649 = vmatmul.mubr.f32.gmra.mrb[0].mxu0 %v441
          %v650 = vpop.f32.mrb[0].mxu0
          %v651 = vadd.f32 %v304, %v650
          %v652 = vpop.f32.mrb[0].mxu0
          %653 = vmatprep.mubr.f32.mxu0 0.0
          %654 = vmatmul.mubr.f32.gmra.mrb[0].mxu0 %v444
          %v655 = vpop.f32.mrb[0].mxu0
          %v656 = vadd.f32 %v304, %v655
          %v657 = vpop.f32.mrb[0].mxu0
          %658 = vmatprep.mubr.f32.mxu0 0.0
          %659 = vmatmul.mubr.f32.gmra.mrb[0].mxu0 %v447
          %v660 = vpop.f32.mrb[0].mxu0
          %v661 = vadd.f32 %v304, %v660
          %v662 = vpop.f32.mrb[0].mxu0
          %663 = vmatprep.mubr.f32.mxu0 0.0
          %664 = vmatmul.mubr.f32.gmra.mrb[0].mxu0 %v450
          %v665 = vpop.f32.mrb[0].mxu0
          %v666 = vadd.f32 %v304, %v665
          %v667 = vpop.f32.mrb[0].mxu0
          %668 = vmatprep.mubr.f32.mxu0 0.0
          %669 = vmatmul.mubr.f32.gmra.mrb[0].mxu0 %v453
          %v670 = vpop.f32.mrb[0].mxu0
          %v671 = vadd.f32 %v304, %v670
          %v672 = vpop.f32.mrb[0].mxu0
          %673 = vmatprep.mubr.f32.mxu0 0.0
          %674 = vmatmul.mubr.f32.gmra.mrb[0].mxu0 %v456
          %v675 = vpop.f32.mrb[0].mxu0
          %v676 = vadd.f32 %v304, %v675
          %v677 = vpop.f32.mrb[0].mxu0
          %678 = vmatprep.mubr.f32.mxu0 0.0
          %679 = vmatmul.mubr.f32.gmra.mrb[0].mxu0 %v459
          %v680 = vpop.f32.mrb[0].mxu0
          %v681 = vadd.f32 %v304, %v680
          %v682 = vpop.f32.mrb[0].mxu0
          %683 = vmatprep.mubr.f32.mxu0 0.0
          %684 = vmatmul.mubr.f32.gmra.mrb[0].mxu0 %v462
          %v685 = vpop.f32.mrb[0].mxu0
          %v686 = vadd.f32 %v304, %v685
          %v687 = vpop.f32.mrb[0].mxu0
          %688 = vmatprep.mubr.f32.mxu0 0.0
          %689 = vmatmul.mubr.f32.gmra.mrb[0].mxu0 %v465
          %v690 = vpop.f32.mrb[0].mxu0
          %v691 = vadd.f32 %v304, %v690
          %v692 = vpop.f32.mrb[0].mxu0
          %693 = vmatprep.mubr.f32.mxu0 0.0
          %694 = vmatmul.mubr.f32.gmra.mrb[0].mxu0 %v468
          %v695 = vpop.f32.mrb[0].mxu0
          %v696 = vadd.f32 %v304, %v695
          %v697 = vpop.f32.mrb[0].mxu0
          %698 = vdwg.mxu0
          %v699 = vpack.c.bf16 %v546, %v541
          %v700 = vpack.c.bf16 %v556, %v551
          %v701 = vpack.c.bf16 %v566, %v561
          %v702 = vpack.c.bf16 %v576, %v571
          %v703 = vpack.c.bf16 %v586, %v581
          %v704 = vpack.c.bf16 %v596, %v591
          %v705 = vpack.c.bf16 %v606, %v601
          %v706 = vpack.c.bf16 %v616, %v611
          %v707 = vpack.c.bf16 %v626, %v621
          %v708 = vpack.c.bf16 %v636, %v631
          %v709 = vpack.c.bf16 %v646, %v641
          %v710 = vpack.c.bf16 %v656, %v651
          %v711 = vpack.c.bf16 %v666, %v661
          %v712 = vpack.c.bf16 %v676, %v671
          %v713 = vpack.c.bf16 %v686, %v681
          %v714 = vpack.c.bf16 %v696, %v691
          %vm715 = vcmask 261120
          %716 = vst.msk [vmem:[#allocation2] sm:$0xff] %vm715, %v699
          %717 = vst.msk [vmem:[#allocation2 + $0x8] sm:$0xff] %vm715, %v700
          %718 = vst.msk [vmem:[#allocation2 + $0x10] sm:$0xff] %vm715, %v701
          %719 = vst.msk [vmem:[#allocation2 + $0x18] sm:$0xff] %vm715, %v702
          %720 = vst.msk [vmem:[#allocation2 + $0x20] sm:$0xff] %vm715, %v703
          %721 = vst.msk [vmem:[#allocation2 + $0x28] sm:$0xff] %vm715, %v704
          %722 = vst.msk [vmem:[#allocation2 + $0x30] sm:$0xff] %vm715, %v705
          %723 = vst.msk [vmem:[#allocation2 + $0x38] sm:$0xff] %vm715, %v706
          %724 = vst.msk [vmem:[#allocation2 + $0x40] sm:$0xff] %vm715, %v707
          %725 = vst.msk [vmem:[#allocation2 + $0x48] sm:$0xff] %vm715, %v708
          %726 = vst.msk [vmem:[#allocation2 + $0x50] sm:$0xff] %vm715, %v709
          %727 = vst.msk [vmem:[#allocation2 + $0x58] sm:$0xff] %vm715, %v710
          %728 = vst.msk [vmem:[#allocation2 + $0x60] sm:$0xff] %vm715, %v711
          %729 = vst.msk [vmem:[#allocation2 + $0x68] sm:$0xff] %vm715, %v712
          %730 = vst.msk [vmem:[#allocation2 + $0x70] sm:$0xff] %vm715, %v713
          %731 = vst.msk [vmem:[#allocation2 + $0x78] sm:$0xff] %vm715, %v714
          %v732 = vld [vmem:[%s3] sm:$0xff]
          %v733 = vld [vmem:[%s3 + $0x8] sm:$0xff]
          %v734 = vld [vmem:[%s3 + $0x10] sm:$0xff]
          %v735 = vld [vmem:[%s3 + $0x18] sm:$0xff]
          %v736 = vld [vmem:[%s3 + $0x20] sm:$0xff]
          %v737 = vld [vmem:[%s4] sm:$0xff]
          %v738 = vld [vmem:[%s4 + $0x8] sm:$0xff]
          %v739 = vld [vmem:[%s4 + $0x10] sm:$0xff]
          %v740 = vld [vmem:[%s4 + $0x18] sm:$0xff]
          %v741 = vld [vmem:[%s4 + $0x20] sm:$0xff]
          %743 = vset.pattern.permute.xlu0 0
          %744 = vperm.xlu0 %743, %v737
          %v745 = vpop.permute.xlu0 %744
          %748 = vset.pattern.permute.xlu0 0
          %749 = vperm.xlu0 %748, %v738
          %v750 = vpop.permute.xlu0 %749
          %753 = vset.pattern.permute.xlu0 0
          %754 = vperm.xlu0 %753, %v739
          %v755 = vpop.permute.xlu0 %754
          %758 = vset.pattern.permute.xlu0 0
          %759 = vperm.xlu0 %758, %v740
          %v760 = vpop.permute.xlu0 %759
          %763 = vset.pattern.permute.xlu0 0
          %764 = vperm.xlu0 %763, %v741
          %v765 = vpop.permute.xlu0 %764
          %v768 = vsel %vm373, %v732, 0
          %v771 = vsel %vm373, %v733, 0
          %v774 = vsel %vm373, %v734, 0
          %v777 = vsel %vm373, %v735, 0
          %v780 = vsel %vm373, %v736, 0
          %v782 = vsel %vm470, %v297, 0
          %v784 = vsel %vm470, %v307, 0
          %786 = vmatprep.subr.mxu0 %v784
          %787 = vmatpush1.msra.mxu0 %v782
          %788 = vmatprep.subr.mxu0 0.0
          %789 = vmatpush1.msra.mxu0 0.0
          %790 = vmatprep.subr.mxu0 0.0
          %791 = vmatpush1.msra.mxu0 0.0
          %792 = vmatprep.subr.mxu0 0.0
          %793 = vmatpush1.msra.mxu0 0.0
          %794 = vmatprep.subr.mxu0 0.0
          %795 = vmatpush1.msra.mxu0 0.0
          %796 = vmatprep.subr.mxu0 0.0
          %797 = vmatpush1.msra.mxu0 0.0
          %798 = vmatprep.subr.mxu0 0.0
          %799 = vmatpush1.msra.mxu0 0.0
          %800 = vmatprep.subr.mxu0 0.0
          %801 = vmatpush1.msra.mxu0 0.0
          %802 = vmatprep.subr.mxu0 0.0
          %803 = vmatpush1.msra.mxu0 0.0
          %804 = vmatprep.subr.mxu0 0.0
          %805 = vmatpush1.msra.mxu0 0.0
          %806 = vmatprep.subr.mxu0 0.0
          %807 = vmatpush1.msra.mxu0 0.0
          %808 = vmatprep.subr.mxu0 0.0
          %809 = vmatpush1.msra.mxu0 0.0
          %810 = vmatprep.subr.mxu0 0.0
          %811 = vmatpush1.msra.mxu0 0.0
          %812 = vmatprep.subr.mxu0 0.0
          %813 = vmatpush1.msra.mxu0 0.0
          %814 = vmatprep.subr.mxu0 0.0
          %815 = vmatpush1.msra.mxu0 0.0
          %816 = vmatprep.subr.mxu0 0.0
          %817 = vmatpush1.msra.mxu0 0.0
          %818 = vmatprep.subr.mxu0 0.0
          %819 = vmatpush1.msra.mxu0 0.0
          %820 = vmatprep.subr.mxu0 0.0
          %821 = vmatpush1.msra.mxu0 0.0
          %822 = vmatprep.subr.mxu0 0.0
          %823 = vmatpush1.msra.mxu0 0.0
          %824 = vmatprep.subr.mxu0 0.0
          %825 = vmatpush1.msra.mxu0 0.0
          %826 = vmatprep.subr.mxu0 0.0
          %827 = vmatpush1.msra.mxu0 0.0
          %828 = vmatprep.subr.mxu0 0.0
          %829 = vmatpush1.msra.mxu0 0.0
          %830 = vmatprep.subr.mxu0 0.0
          %831 = vmatpush1.msra.mxu0 0.0
          %832 = vmatprep.subr.mxu0 0.0
          %833 = vmatpush1.msra.mxu0 0.0
          %834 = vmatprep.subr.mxu0 0.0
          %835 = vmatpush1.msra.mxu0 0.0
          %836 = vmatprep.subr.mxu0 0.0
          %837 = vmatpush1.msra.mxu0 0.0
          %838 = vmatprep.subr.mxu0 0.0
          %839 = vmatpush1.msra.mxu0 0.0
          %840 = vmatprep.subr.mxu0 0.0
          %841 = vmatpush1.msra.mxu0 0.0
          %842 = vmatprep.subr.mxu0 0.0
          %843 = vmatpush1.msra.mxu0 0.0
          %844 = vmatprep.subr.mxu0 0.0
          %845 = vmatpush1.msra.mxu0 0.0
          %846 = vmatprep.subr.mxu0 0.0
          %847 = vmatpush1.msra.mxu0 0.0
          %848 = vmatprep.subr.mxu0 0.0
          %849 = vmatpush1.msra.mxu0 0.0
          %850 = vmatprep.mubr.f32.mxu0 0.0
          %851 = vmatmul.mubr.f32.gmra.mrb[0].mxu0 %v768
          %v852 = vpop.f32.mrb[0].mxu0
          %v853 = vadd.f32 %v745, %v852
          %v854 = vpop.f32.mrb[0].mxu0
          %v855 = vadd.f32 %v745, %v854
          %856 = vmatprep.mubr.f32.mxu0 0.0
          %857 = vmatmul.mubr.f32.gmra.mrb[0].mxu0 %v771
          %v858 = vpop.f32.mrb[0].mxu0
          %v859 = vadd.f32 %v750, %v858
          %v860 = vpop.f32.mrb[0].mxu0
          %v861 = vadd.f32 %v750, %v860
          %862 = vmatprep.mubr.f32.mxu0 0.0
          %863 = vmatmul.mubr.f32.gmra.mrb[0].mxu0 %v774
          %v864 = vpop.f32.mrb[0].mxu0
          %v865 = vadd.f32 %v755, %v864
          %v866 = vpop.f32.mrb[0].mxu0
          %v867 = vadd.f32 %v755, %v866
          %868 = vmatprep.mubr.f32.mxu0 0.0
          %869 = vmatmul.mubr.f32.gmra.mrb[0].mxu0 %v777
          %v870 = vpop.f32.mrb[0].mxu0
          %v871 = vadd.f32 %v760, %v870
          %v872 = vpop.f32.mrb[0].mxu0
          %v873 = vadd.f32 %v760, %v872
          %874 = vmatprep.mubr.f32.mxu0 0.0
          %875 = vmatmul.mubr.f32.gmra.mrb[0].mxu0 %v780
          %v876 = vpop.f32.mrb[0].mxu0
          %v877 = vadd.f32 %v765, %v876
          %v878 = vpop.f32.mrb[0].mxu0
          %v879 = vadd.f32 %v765, %v878
          %880 = vdwg.mxu0
          %v881 = vpack.c.bf16 %v859, %v853
          %v882 = vpack.c.bf16 %v861, %v855
          %v883 = vpack.c.bf16 %v871, %v865
          %v884 = vpack.c.bf16 %v873, %v867
          %v885 = vpack.c.bf16 %v877, %v877
          %v886 = vpack.c.bf16 %v879, %v879
          %v893 = vunpack.c.l.b16 %v881
          %v894 = vunpack.c.l.b16 %v882
          %v895 = vunpack.c.h.b16 %v881
          %v896 = vunpack.c.h.b16 %v882
          %v897 = vunpack.c.l.b16 %v883
          %v898 = vunpack.c.l.b16 %v884
          %v899 = vunpack.c.h.b16 %v883
          %v900 = vunpack.c.h.b16 %v884
          %v901 = vunpack.c.l.b16 %v885
          %v902 = vunpack.c.l.b16 %v886
          %v903 = vpack.c.b16 %v894, %v893
          %v904 = vpack.c.b16 %v896, %v895
          %v905 = vpack.c.b16 %v898, %v897
          %v906 = vpack.c.b16 %v900, %v899
          %v907 = vpack.c.b16 %v902, %v901
          %913 = vst [vmem:[#allocation3] sm:$0xff] %v903
          %914 = vst [vmem:[#allocation3 + $0x8] sm:$0xff] %v904
          %915 = vst [vmem:[#allocation3 + $0x10] sm:$0xff] %v905
          %916 = vst [vmem:[#allocation3 + $0x18] sm:$0xff] %v906
          %917 = vst [vmem:[#allocation3 + $0x20] sm:$0xff] %v907
        $region44: #{tpu_custom_call.1} parent=39 // pred_fallthru
          _
        %s918 = sadd.s32 %s30, %s31
        %s919 = smul.u32 %s918, 256
        %s920 = sshra.s32 %s919, 4
        %s921 = sand.u32 %s919, 15
        %s922 = smul.addr %s920, 8
        %s923 = scalar_lea.vmem [#allocation2], %s922
        %v924 = vld [vmem:[%s923] sm:$0xff]
        %v925 = vld [vmem:[%s923 + $0x8] sm:$0xff]
        %v926 = vld [vmem:[%s923 + $0x10] sm:$0xff]
        %v927 = vld [vmem:[%s923 + $0x18] sm:$0xff]
        %v928 = vld [vmem:[%s923 + $0x20] sm:$0xff]
        %v929 = vld [vmem:[%s923 + $0x28] sm:$0xff]
        %v930 = vld [vmem:[%s923 + $0x30] sm:$0xff]
        %v931 = vld [vmem:[%s923 + $0x38] sm:$0xff]
        %v932 = vld [vmem:[%s923 + $0x40] sm:$0xff]
        %v933 = vld [vmem:[%s923 + $0x48] sm:$0xff]
        %v934 = vld [vmem:[%s923 + $0x50] sm:$0xff]
        %v935 = vld [vmem:[%s923 + $0x58] sm:$0xff]
        %v936 = vld [vmem:[%s923 + $0x60] sm:$0xff]
        %v937 = vld [vmem:[%s923 + $0x68] sm:$0xff]
        %v938 = vld [vmem:[%s923 + $0x70] sm:$0xff]
        %v939 = vld [vmem:[%s923 + $0x78] sm:$0xff]
        %v940 = vld [vmem:[#allocation3] sm:$0xff]
        %v941 = vld [vmem:[#allocation3 + $0x8] sm:$0xff]
        %v942 = vld [vmem:[#allocation3 + $0x10] sm:$0xff]
        %v943 = vld [vmem:[#allocation3 + $0x18] sm:$0xff]
        %v944 = vld [vmem:[#allocation3 + $0x20] sm:$0xff]
        %v949 = vunpack.c.l.b16 %v940
        %v950 = vunpack.c.h.b16 %v940
        %v951 = vunpack.c.l.b16 %v941
        %v952 = vunpack.c.h.b16 %v941
        %v953 = vunpack.c.l.b16 %v942
        %v954 = vunpack.c.h.b16 %v942
        %v955 = vunpack.c.l.b16 %v943
        %v956 = vunpack.c.h.b16 %v943
        %v957 = vpack.c.b16 %v951, %v949
        %v958 = vpack.c.b16 %v952, %v950
        %v959 = vpack.c.b16 %v955, %v953
        %v960 = vpack.c.b16 %v956, %v954
        %vm965 = vcmask 261120
        %v967 = vsel %vm965, %v924, 0
        %v970 = vsel %vm965, %v925, 0
        %v973 = vsel %vm965, %v926, 0
        %v976 = vsel %vm965, %v927, 0
        %v979 = vsel %vm965, %v928, 0
        %v982 = vsel %vm965, %v929, 0
        %v985 = vsel %vm965, %v930, 0
        %v988 = vsel %vm965, %v931, 0
        %v991 = vsel %vm965, %v932, 0
        %v994 = vsel %vm965, %v933, 0
        %v997 = vsel %vm965, %v934, 0
        %v1000 = vsel %vm965, %v935, 0
        %v1003 = vsel %vm965, %v936, 0
        %v1006 = vsel %vm965, %v937, 0
        %v1009 = vsel %vm965, %v938, 0
        %v1012 = vsel %vm965, %v939, 0
        %1014 = vmatprep.subr.bf16.mxu0 %v958
        %1015 = vmatpush1.bf16.msra.mxu0 %v957
        %1016 = vmatprep.subr.bf16.mxu0 %v960
        %1017 = vmatpush1.bf16.msra.mxu0 %v959
        %1018 = vmatprep.subr.bf16.mxu0 0
        %1019 = vmatpush1.bf16.msra.mxu0 0
        %1020 = vmatprep.subr.bf16.mxu0 0
        %1021 = vmatpush1.bf16.msra.mxu0 0
        %1022 = vmatprep.subr.bf16.mxu0 0
        %1023 = vmatpush1.bf16.msra.mxu0 0
        %1024 = vmatprep.subr.bf16.mxu0 0
        %1025 = vmatpush1.bf16.msra.mxu0 0
        %1026 = vmatprep.subr.bf16.mxu0 0
        %1027 = vmatpush1.bf16.msra.mxu0 0
        %1028 = vmatprep.subr.bf16.mxu0 0
        %1029 = vmatpush1.bf16.msra.mxu0 0
        %1030 = vmatprep.subr.bf16.mxu0 0
        %1031 = vmatpush1.bf16.msra.mxu0 0
        %1032 = vmatprep.subr.bf16.mxu0 0
        %1033 = vmatpush1.bf16.msra.mxu0 0
        %1034 = vmatprep.subr.bf16.mxu0 0
        %1035 = vmatpush1.bf16.msra.mxu0 0
        %1036 = vmatprep.subr.bf16.mxu0 0
        %1037 = vmatpush1.bf16.msra.mxu0 0
        %1038 = vmatprep.subr.bf16.mxu0 0
        %1039 = vmatpush1.bf16.msra.mxu0 0
        %1040 = vmatprep.subr.bf16.mxu0 0
        %1041 = vmatpush1.bf16.msra.mxu0 0
        %1042 = vmatprep.subr.bf16.mxu0 0
        %1043 = vmatpush1.bf16.msra.mxu0 0
        %1044 = vmatprep.subr.bf16.mxu0 0
        %1045 = vmatpush1.bf16.msra.mxu0 0
        %1046 = vmatprep.mubr.bf16.mxu0 0
        %1047 = vmatmul.mubr.bf16.gmra.mrb[0].mxu0 %v967
        %v1048 = vpop.f32.mrb[0].mxu0
        %v1049 = vadd.f32 0.0, %v1048
        %v1050 = vpop.f32.mrb[0].mxu0
        %v1051 = vadd.f32 0.0, %v1050
        %v1052 = vpop.f32.mrb[0].mxu0
        %v1053 = vadd.f32 0.0, %v1052
        %v1054 = vpop.f32.mrb[0].mxu0
        %v1055 = vadd.f32 0.0, %v1054
        %1056 = vmatprep.mubr.bf16.mxu0 0
        %1057 = vmatmul.mubr.bf16.gmra.mrb[0].mxu0 %v970
        %v1058 = vpop.f32.mrb[0].mxu0
        %v1059 = vadd.f32 0.0, %v1058
        %v1060 = vpop.f32.mrb[0].mxu0
        %v1061 = vadd.f32 0.0, %v1060
        %v1062 = vpop.f32.mrb[0].mxu0
        %v1063 = vadd.f32 0.0, %v1062
        %v1064 = vpop.f32.mrb[0].mxu0
        %v1065 = vadd.f32 0.0, %v1064
        %1066 = vmatprep.mubr.bf16.mxu0 0
        %1067 = vmatmul.mubr.bf16.gmra.mrb[0].mxu0 %v973
        %v1068 = vpop.f32.mrb[0].mxu0
        %v1069 = vadd.f32 0.0, %v1068
        %v1070 = vpop.f32.mrb[0].mxu0
        %v1071 = vadd.f32 0.0, %v1070
        %v1072 = vpop.f32.mrb[0].mxu0
        %v1073 = vadd.f32 0.0, %v1072
        %v1074 = vpop.f32.mrb[0].mxu0
        %v1075 = vadd.f32 0.0, %v1074
        %1076 = vmatprep.mubr.bf16.mxu0 0
        %1077 = vmatmul.mubr.bf16.gmra.mrb[0].mxu0 %v976
        %v1078 = vpop.f32.mrb[0].mxu0
        %v1079 = vadd.f32 0.0, %v1078
        %v1080 = vpop.f32.mrb[0].mxu0
        %v1081 = vadd.f32 0.0, %v1080
        %v1082 = vpop.f32.mrb[0].mxu0
        %v1083 = vadd.f32 0.0, %v1082
        %v1084 = vpop.f32.mrb[0].mxu0
        %v1085 = vadd.f32 0.0, %v1084
        %1086 = vmatprep.mubr.bf16.mxu0 0
        %1087 = vmatmul.mubr.bf16.gmra.mrb[0].mxu0 %v979
        %v1088 = vpop.f32.mrb[0].mxu0
        %v1089 = vadd.f32 0.0, %v1088
        %v1090 = vpop.f32.mrb[0].mxu0
        %v1091 = vadd.f32 0.0, %v1090
        %v1092 = vpop.f32.mrb[0].mxu0
        %v1093 = vadd.f32 0.0, %v1092
        %v1094 = vpop.f32.mrb[0].mxu0
        %v1095 = vadd.f32 0.0, %v1094
        %1096 = vmatprep.mubr.bf16.mxu0 0
        %1097 = vmatmul.mubr.bf16.gmra.mrb[0].mxu0 %v982
        %v1098 = vpop.f32.mrb[0].mxu0
        %v1099 = vadd.f32 0.0, %v1098
        %v1100 = vpop.f32.mrb[0].mxu0
        %v1101 = vadd.f32 0.0, %v1100
        %v1102 = vpop.f32.mrb[0].mxu0
        %v1103 = vadd.f32 0.0, %v1102
        %v1104 = vpop.f32.mrb[0].mxu0
        %v1105 = vadd.f32 0.0, %v1104
        %1106 = vmatprep.mubr.bf16.mxu0 0
        %1107 = vmatmul.mubr.bf16.gmra.mrb[0].mxu0 %v985
        %v1108 = vpop.f32.mrb[0].mxu0
        %v1109 = vadd.f32 0.0, %v1108
        %v1110 = vpop.f32.mrb[0].mxu0
        %v1111 = vadd.f32 0.0, %v1110
        %v1112 = vpop.f32.mrb[0].mxu0
        %v1113 = vadd.f32 0.0, %v1112
        %v1114 = vpop.f32.mrb[0].mxu0
        %v1115 = vadd.f32 0.0, %v1114
        %1116 = vmatprep.mubr.bf16.mxu0 0
        %1117 = vmatmul.mubr.bf16.gmra.mrb[0].mxu0 %v988
        %v1118 = vpop.f32.mrb[0].mxu0
        %v1119 = vadd.f32 0.0, %v1118
        %v1120 = vpop.f32.mrb[0].mxu0
        %v1121 = vadd.f32 0.0, %v1120
        %v1122 = vpop.f32.mrb[0].mxu0
        %v1123 = vadd.f32 0.0, %v1122
        %v1124 = vpop.f32.mrb[0].mxu0
        %v1125 = vadd.f32 0.0, %v1124
        %1126 = vmatprep.mubr.bf16.mxu0 0
        %1127 = vmatmul.mubr.bf16.gmra.mrb[0].mxu0 %v991
        %v1128 = vpop.f32.mrb[0].mxu0
        %v1129 = vadd.f32 0.0, %v1128
        %v1130 = vpop.f32.mrb[0].mxu0
        %v1131 = vadd.f32 0.0, %v1130
        %v1132 = vpop.f32.mrb[0].mxu0
        %v1133 = vadd.f32 0.0, %v1132
        %v1134 = vpop.f32.mrb[0].mxu0
        %v1135 = vadd.f32 0.0, %v1134
        %1136 = vmatprep.mubr.bf16.mxu0 0
        %1137 = vmatmul.mubr.bf16.gmra.mrb[0].mxu0 %v994
        %v1138 = vpop.f32.mrb[0].mxu0
        %v1139 = vadd.f32 0.0, %v1138
        %v1140 = vpop.f32.mrb[0].mxu0
        %v1141 = vadd.f32 0.0, %v1140
        %v1142 = vpop.f32.mrb[0].mxu0
        %v1143 = vadd.f32 0.0, %v1142
        %v1144 = vpop.f32.mrb[0].mxu0
        %v1145 = vadd.f32 0.0, %v1144
        %1146 = vmatprep.mubr.bf16.mxu0 0
        %1147 = vmatmul.mubr.bf16.gmra.mrb[0].mxu0 %v997
        %v1148 = vpop.f32.mrb[0].mxu0
        %v1149 = vadd.f32 0.0, %v1148
        %v1150 = vpop.f32.mrb[0].mxu0
        %v1151 = vadd.f32 0.0, %v1150
        %v1152 = vpop.f32.mrb[0].mxu0
        %v1153 = vadd.f32 0.0, %v1152
        %v1154 = vpop.f32.mrb[0].mxu0
        %v1155 = vadd.f32 0.0, %v1154
        %1156 = vmatprep.mubr.bf16.mxu0 0
        %1157 = vmatmul.mubr.bf16.gmra.mrb[0].mxu0 %v1000
        %v1158 = vpop.f32.mrb[0].mxu0
        %v1159 = vadd.f32 0.0, %v1158
        %v1160 = vpop.f32.mrb[0].mxu0
        %v1161 = vadd.f32 0.0, %v1160
        %v1162 = vpop.f32.mrb[0].mxu0
        %v1163 = vadd.f32 0.0, %v1162
        %v1164 = vpop.f32.mrb[0].mxu0
        %v1165 = vadd.f32 0.0, %v1164
        %1166 = vmatprep.mubr.bf16.mxu0 0
        %1167 = vmatmul.mubr.bf16.gmra.mrb[0].mxu0 %v1003
        %v1168 = vpop.f32.mrb[0].mxu0
        %v1169 = vadd.f32 0.0, %v1168
        %v1170 = vpop.f32.mrb[0].mxu0
        %v1171 = vadd.f32 0.0, %v1170
        %v1172 = vpop.f32.mrb[0].mxu0
        %v1173 = vadd.f32 0.0, %v1172
        %v1174 = vpop.f32.mrb[0].mxu0
        %v1175 = vadd.f32 0.0, %v1174
        %1176 = vmatprep.mubr.bf16.mxu0 0
        %1177 = vmatmul.mubr.bf16.gmra.mrb[0].mxu0 %v1006
        %v1178 = vpop.f32.mrb[0].mxu0
        %v1179 = vadd.f32 0.0, %v1178
        %v1180 = vpop.f32.mrb[0].mxu0
        %v1181 = vadd.f32 0.0, %v1180
        %v1182 = vpop.f32.mrb[0].mxu0
        %v1183 = vadd.f32 0.0, %v1182
        %v1184 = vpop.f32.mrb[0].mxu0
        %v1185 = vadd.f32 0.0, %v1184
        %1186 = vmatprep.mubr.bf16.mxu0 0
        %1187 = vmatmul.mubr.bf16.gmra.mrb[0].mxu0 %v1009
        %v1188 = vpop.f32.mrb[0].mxu0
        %v1189 = vadd.f32 0.0, %v1188
        %v1190 = vpop.f32.mrb[0].mxu0
        %v1191 = vadd.f32 0.0, %v1190
        %v1192 = vpop.f32.mrb[0].mxu0
        %v1193 = vadd.f32 0.0, %v1192
        %v1194 = vpop.f32.mrb[0].mxu0
        %v1195 = vadd.f32 0.0, %v1194
        %1196 = vmatprep.mubr.bf16.mxu0 0
        %1197 = vmatmul.mubr.bf16.gmra.mrb[0].mxu0 %v1012
        %v1198 = vpop.f32.mrb[0].mxu0
        %v1199 = vadd.f32 0.0, %v1198
        %v1200 = vpop.f32.mrb[0].mxu0
        %v1201 = vadd.f32 0.0, %v1200
        %v1202 = vpop.f32.mrb[0].mxu0
        %v1203 = vadd.f32 0.0, %v1202
        %v1204 = vpop.f32.mrb[0].mxu0
        %v1205 = vadd.f32 0.0, %v1204
        %1206 = vdwg.mxu0
        %v1207 = vmax.f32 %v1049, %v1051
        %1208 = vmax.xlane.f32.xlu0 %v1207
        %v1209 = vpop.xlane.xlu0 %1208
        %v1210 = vmax.f32 %v1053, %v1055
        %1211 = vmax.xlane.f32.xlu0 %v1210
        %v1212 = vpop.xlane.xlu0 %1211
        %v1213 = vmax.f32 %v1059, %v1061
        %1214 = vmax.xlane.f32.xlu0 %v1213
        %v1215 = vpop.xlane.xlu0 %1214
        %v1216 = vmax.f32 %v1063, %v1065
        %1217 = vmax.xlane.f32.xlu0 %v1216
        %v1218 = vpop.xlane.xlu0 %1217
        %v1219 = vmax.f32 %v1069, %v1071
        %1220 = vmax.xlane.f32.xlu0 %v1219
        %v1221 = vpop.xlane.xlu0 %1220
        %v1222 = vmax.f32 %v1073, %v1075
        %1223 = vmax.xlane.f32.xlu0 %v1222
        %v1224 = vpop.xlane.xlu0 %1223
        %v1225 = vmax.f32 %v1079, %v1081
        %1226 = vmax.xlane.f32.xlu0 %v1225
        %v1227 = vpop.xlane.xlu0 %1226
        %v1228 = vmax.f32 %v1083, %v1085
        %1229 = vmax.xlane.f32.xlu0 %v1228
        %v1230 = vpop.xlane.xlu0 %1229
        %v1231 = vmax.f32 %v1089, %v1091
        %1232 = vmax.xlane.f32.xlu0 %v1231
        %v1233 = vpop.xlane.xlu0 %1232
        %v1234 = vmax.f32 %v1093, %v1095
        %1235 = vmax.xlane.f32.xlu0 %v1234
        %v1236 = vpop.xlane.xlu0 %1235
        %v1237 = vmax.f32 %v1099, %v1101
        %1238 = vmax.xlane.f32.xlu0 %v1237
        %v1239 = vpop.xlane.xlu0 %1238
        %v1240 = vmax.f32 %v1103, %v1105
        %1241 = vmax.xlane.f32.xlu0 %v1240
        %v1242 = vpop.xlane.xlu0 %1241
        %v1243 = vmax.f32 %v1109, %v1111
        %1244 = vmax.xlane.f32.xlu0 %v1243
        %v1245 = vpop.xlane.xlu0 %1244
        %v1246 = vmax.f32 %v1113, %v1115
        %1247 = vmax.xlane.f32.xlu0 %v1246
        %v1248 = vpop.xlane.xlu0 %1247
        %v1249 = vmax.f32 %v1119, %v1121
        %1250 = vmax.xlane.f32.xlu0 %v1249
        %v1251 = vpop.xlane.xlu0 %1250
        %v1252 = vmax.f32 %v1123, %v1125
        %1253 = vmax.xlane.f32.xlu0 %v1252
        %v1254 = vpop.xlane.xlu0 %1253
        %v1255 = vmax.f32 %v1129, %v1131
        %1256 = vmax.xlane.f32.xlu0 %v1255
        %v1257 = vpop.xlane.xlu0 %1256
        %v1258 = vmax.f32 %v1133, %v1135
        %1259 = vmax.xlane.f32.xlu0 %v1258
        %v1260 = vpop.xlane.xlu0 %1259
        %v1261 = vmax.f32 %v1139, %v1141
        %1262 = vmax.xlane.f32.xlu0 %v1261
        %v1263 = vpop.xlane.xlu0 %1262
        %v1264 = vmax.f32 %v1143, %v1145
        %1265 = vmax.xlane.f32.xlu0 %v1264
        %v1266 = vpop.xlane.xlu0 %1265
        %v1267 = vmax.f32 %v1149, %v1151
        %1268 = vmax.xlane.f32.xlu0 %v1267
        %v1269 = vpop.xlane.xlu0 %1268
        %v1270 = vmax.f32 %v1153, %v1155
        %1271 = vmax.xlane.f32.xlu0 %v1270
        %v1272 = vpop.xlane.xlu0 %1271
        %v1273 = vmax.f32 %v1159, %v1161
        %1274 = vmax.xlane.f32.xlu0 %v1273
        %v1275 = vpop.xlane.xlu0 %1274
        %v1276 = vmax.f32 %v1163, %v1165
        %1277 = vmax.xlane.f32.xlu0 %v1276
        %v1278 = vpop.xlane.xlu0 %1277
        %v1279 = vmax.f32 %v1169, %v1171
        %1280 = vmax.xlane.f32.xlu0 %v1279
        %v1281 = vpop.xlane.xlu0 %1280
        %v1282 = vmax.f32 %v1173, %v1175
        %1283 = vmax.xlane.f32.xlu0 %v1282
        %v1284 = vpop.xlane.xlu0 %1283
        %v1285 = vmax.f32 %v1179, %v1181
        %1286 = vmax.xlane.f32.xlu0 %v1285
        %v1287 = vpop.xlane.xlu0 %1286
        %v1288 = vmax.f32 %v1183, %v1185
        %1289 = vmax.xlane.f32.xlu0 %v1288
        %v1290 = vpop.xlane.xlu0 %1289
        %v1291 = vmax.f32 %v1189, %v1191
        %1292 = vmax.xlane.f32.xlu0 %v1291
        %v1293 = vpop.xlane.xlu0 %1292
        %v1294 = vmax.f32 %v1193, %v1195
        %1295 = vmax.xlane.f32.xlu0 %v1294
        %v1296 = vpop.xlane.xlu0 %1295
        %v1297 = vmax.f32 %v1199, %v1201
        %1298 = vmax.xlane.f32.xlu0 %v1297
        %v1299 = vpop.xlane.xlu0 %1298
        %v1300 = vmax.f32 %v1203, %v1205
        %1301 = vmax.xlane.f32.xlu0 %v1300
        %v1302 = vpop.xlane.xlu0 %1301
        %v1303 = vsub.f32 %v1049, %v1209
        %v1304 = vsub.f32 %v1051, %v1209
        %v1305 = vsub.f32 %v1053, %v1212
        %v1306 = vsub.f32 %v1055, %v1212
        %v1307 = vsub.f32 %v1059, %v1215
        %v1308 = vsub.f32 %v1061, %v1215
        %v1309 = vsub.f32 %v1063, %v1218
        %v1310 = vsub.f32 %v1065, %v1218
        %v1311 = vsub.f32 %v1069, %v1221
        %v1312 = vsub.f32 %v1071, %v1221
        %v1313 = vsub.f32 %v1073, %v1224
        %v1314 = vsub.f32 %v1075, %v1224
        %v1315 = vsub.f32 %v1079, %v1227
        %v1316 = vsub.f32 %v1081, %v1227
        %v1317 = vsub.f32 %v1083, %v1230
        %v1318 = vsub.f32 %v1085, %v1230
        %v1319 = vsub.f32 %v1089, %v1233
        %v1320 = vsub.f32 %v1091, %v1233
        %v1321 = vsub.f32 %v1093, %v1236
        %v1322 = vsub.f32 %v1095, %v1236
        %v1323 = vsub.f32 %v1099, %v1239
        %v1324 = vsub.f32 %v1101, %v1239
        %v1325 = vsub.f32 %v1103, %v1242
        %v1326 = vsub.f32 %v1105, %v1242
        %v1327 = vsub.f32 %v1109, %v1245
        %v1328 = vsub.f32 %v1111, %v1245
        %v1329 = vsub.f32 %v1113, %v1248
        %v1330 = vsub.f32 %v1115, %v1248
        %v1331 = vsub.f32 %v1119, %v1251
        %v1332 = vsub.f32 %v1121, %v1251
        %v1333 = vsub.f32 %v1123, %v1254
        %v1334 = vsub.f32 %v1125, %v1254
        %v1335 = vsub.f32 %v1129, %v1257
        %v1336 = vsub.f32 %v1131, %v1257
        %v1337 = vsub.f32 %v1133, %v1260
        %v1338 = vsub.f32 %v1135, %v1260
        %v1339 = vsub.f32 %v1139, %v1263
        %v1340 = vsub.f32 %v1141, %v1263
        %v1341 = vsub.f32 %v1143, %v1266
        %v1342 = vsub.f32 %v1145, %v1266
        %v1343 = vsub.f32 %v1149, %v1269
        %v1344 = vsub.f32 %v1151, %v1269
        %v1345 = vsub.f32 %v1153, %v1272
        %v1346 = vsub.f32 %v1155, %v1272
        %v1347 = vsub.f32 %v1159, %v1275
        %v1348 = vsub.f32 %v1161, %v1275
        %v1349 = vsub.f32 %v1163, %v1278
        %v1350 = vsub.f32 %v1165, %v1278
        %v1351 = vsub.f32 %v1169, %v1281
        %v1352 = vsub.f32 %v1171, %v1281
        %v1353 = vsub.f32 %v1173, %v1284
        %v1354 = vsub.f32 %v1175, %v1284
        %v1355 = vsub.f32 %v1179, %v1287
        %v1356 = vsub.f32 %v1181, %v1287
        %v1357 = vsub.f32 %v1183, %v1290
        %v1358 = vsub.f32 %v1185, %v1290
        %v1359 = vsub.f32 %v1189, %v1293
        %v1360 = vsub.f32 %v1191, %v1293
        %v1361 = vsub.f32 %v1193, %v1296
        %v1362 = vsub.f32 %v1195, %v1296
        %v1363 = vsub.f32 %v1199, %v1299
        %v1364 = vsub.f32 %v1201, %v1299
        %v1365 = vsub.f32 %v1203, %v1302
        %v1366 = vsub.f32 %v1205, %v1302
        %v1367 = vmul.f32 %v1303, 1.442695
        %v1368 = vpow.pop %v1367
        %v1369 = vmul.f32 %v1304, 1.442695
        %v1370 = vpow.pop %v1369
        %v1371 = vmul.f32 %v1305, 1.442695
        %v1372 = vpow.pop %v1371
        %v1373 = vmul.f32 %v1306, 1.442695
        %v1374 = vpow.pop %v1373
        %v1375 = vmul.f32 %v1307, 1.442695
        %v1376 = vpow.pop %v1375
        %v1377 = vmul.f32 %v1308, 1.442695
        %v1378 = vpow.pop %v1377
        %v1379 = vmul.f32 %v1309, 1.442695
        %v1380 = vpow.pop %v1379
        %v1381 = vmul.f32 %v1310, 1.442695
        %v1382 = vpow.pop %v1381
        %v1383 = vmul.f32 %v1311, 1.442695
        %v1384 = vpow.pop %v1383
        %v1385 = vmul.f32 %v1312, 1.442695
        %v1386 = vpow.pop %v1385
        %v1387 = vmul.f32 %v1313, 1.442695
        %v1388 = vpow.pop %v1387
        %v1389 = vmul.f32 %v1314, 1.442695
        %v1390 = vpow.pop %v1389
        %v1391 = vmul.f32 %v1315, 1.442695
        %v1392 = vpow.pop %v1391
        %v1393 = vmul.f32 %v1316, 1.442695
        %v1394 = vpow.pop %v1393
        %v1395 = vmul.f32 %v1317, 1.442695
        %v1396 = vpow.pop %v1395
        %v1397 = vmul.f32 %v1318, 1.442695
        %v1398 = vpow.pop %v1397
        %v1399 = vmul.f32 %v1319, 1.442695
        %v1400 = vpow.pop %v1399
        %v1401 = vmul.f32 %v1320, 1.442695
        %v1402 = vpow.pop %v1401
        %v1403 = vmul.f32 %v1321, 1.442695
        %v1404 = vpow.pop %v1403
        %v1405 = vmul.f32 %v1322, 1.442695
        %v1406 = vpow.pop %v1405
        %v1407 = vmul.f32 %v1323, 1.442695
        %v1408 = vpow.pop %v1407
        %v1409 = vmul.f32 %v1324, 1.442695
        %v1410 = vpow.pop %v1409
        %v1411 = vmul.f32 %v1325, 1.442695
        %v1412 = vpow.pop %v1411
        %v1413 = vmul.f32 %v1326, 1.442695
        %v1414 = vpow.pop %v1413
        %v1415 = vmul.f32 %v1327, 1.442695
        %v1416 = vpow.pop %v1415
        %v1417 = vmul.f32 %v1328, 1.442695
        %v1418 = vpow.pop %v1417
        %v1419 = vmul.f32 %v1329, 1.442695
        %v1420 = vpow.pop %v1419
        %v1421 = vmul.f32 %v1330, 1.442695
        %v1422 = vpow.pop %v1421
        %v1423 = vmul.f32 %v1331, 1.442695
        %v1424 = vpow.pop %v1423
        %v1425 = vmul.f32 %v1332, 1.442695
        %v1426 = vpow.pop %v1425
        %v1427 = vmul.f32 %v1333, 1.442695
        %v1428 = vpow.pop %v1427
        %v1429 = vmul.f32 %v1334, 1.442695
        %v1430 = vpow.pop %v1429
        %v1431 = vmul.f32 %v1335, 1.442695
        %v1432 = vpow.pop %v1431
        %v1433 = vmul.f32 %v1336, 1.442695
        %v1434 = vpow.pop %v1433
        %v1435 = vmul.f32 %v1337, 1.442695
        %v1436 = vpow.pop %v1435
        %v1437 = vmul.f32 %v1338, 1.442695
        %v1438 = vpow.pop %v1437
        %v1439 = vmul.f32 %v1339, 1.442695
        %v1440 = vpow.pop %v1439
        %v1441 = vmul.f32 %v1340, 1.442695
        %v1442 = vpow.pop %v1441
        %v1443 = vmul.f32 %v1341, 1.442695
        %v1444 = vpow.pop %v1443
        %v1445 = vmul.f32 %v1342, 1.442695
        %v1446 = vpow.pop %v1445
        %v1447 = vmul.f32 %v1343, 1.442695
        %v1448 = vpow.pop %v1447
        %v1449 = vmul.f32 %v1344, 1.442695
        %v1450 = vpow.pop %v1449
        %v1451 = vmul.f32 %v1345, 1.442695
        %v1452 = vpow.pop %v1451
        %v1453 = vmul.f32 %v1346, 1.442695
        %v1454 = vpow.pop %v1453
        %v1455 = vmul.f32 %v1347, 1.442695
        %v1456 = vpow.pop %v1455
        %v1457 = vmul.f32 %v1348, 1.442695
        %v1458 = vpow.pop %v1457
        %v1459 = vmul.f32 %v1349, 1.442695
        %v1460 = vpow.pop %v1459
        %v1461 = vmul.f32 %v1350, 1.442695
        %v1462 = vpow.pop %v1461
        %v1463 = vmul.f32 %v1351, 1.442695
        %v1464 = vpow.pop %v1463
        %v1465 = vmul.f32 %v1352, 1.442695
        %v1466 = vpow.pop %v1465
        %v1467 = vmul.f32 %v1353, 1.442695
        %v1468 = vpow.pop %v1467
        %v1469 = vmul.f32 %v1354, 1.442695
        %v1470 = vpow.pop %v1469
        %v1471 = vmul.f32 %v1355, 1.442695
        %v1472 = vpow.pop %v1471
        %v1473 = vmul.f32 %v1356, 1.442695
        %v1474 = vpow.pop %v1473
        %v1475 = vmul.f32 %v1357, 1.442695
        %v1476 = vpow.pop %v1475
        %v1477 = vmul.f32 %v1358, 1.442695
        %v1478 = vpow.pop %v1477
        %v1479 = vmul.f32 %v1359, 1.442695
        %v1480 = vpow.pop %v1479
        %v1481 = vmul.f32 %v1360, 1.442695
        %v1482 = vpow.pop %v1481
        %v1483 = vmul.f32 %v1361, 1.442695
        %v1484 = vpow.pop %v1483
        %v1485 = vmul.f32 %v1362, 1.442695
        %v1486 = vpow.pop %v1485
        %v1487 = vmul.f32 %v1363, 1.442695
        %v1488 = vpow.pop %v1487
        %v1489 = vmul.f32 %v1364, 1.442695
        %v1490 = vpow.pop %v1489
        %v1491 = vmul.f32 %v1365, 1.442695
        %v1492 = vpow.pop %v1491
        %v1493 = vmul.f32 %v1366, 1.442695
        %v1494 = vpow.pop %v1493
        %v1495 = vadd.f32 %v1368, %v1370
        %1496 = vadd.xlane.f32.xlu0 %v1495
        %v1497 = vpop.xlane.xlu0 %1496
        %v1498 = vadd.f32 %v1372, %v1374
        %1499 = vadd.xlane.f32.xlu0 %v1498
        %v1500 = vpop.xlane.xlu0 %1499
        %v1501 = vadd.f32 %v1376, %v1378
        %1502 = vadd.xlane.f32.xlu0 %v1501
        %v1503 = vpop.xlane.xlu0 %1502
        %v1504 = vadd.f32 %v1380, %v1382
        %1505 = vadd.xlane.f32.xlu0 %v1504
        %v1506 = vpop.xlane.xlu0 %1505
        %v1507 = vadd.f32 %v1384, %v1386
        %1508 = vadd.xlane.f32.xlu0 %v1507
        %v1509 = vpop.xlane.xlu0 %1508
        %v1510 = vadd.f32 %v1388, %v1390
        %1511 = vadd.xlane.f32.xlu0 %v1510
        %v1512 = vpop.xlane.xlu0 %1511
        %v1513 = vadd.f32 %v1392, %v1394
        %1514 = vadd.xlane.f32.xlu0 %v1513
        %v1515 = vpop.xlane.xlu0 %1514
        %v1516 = vadd.f32 %v1396, %v1398
        %1517 = vadd.xlane.f32.xlu0 %v1516
        %v1518 = vpop.xlane.xlu0 %1517
        %v1519 = vadd.f32 %v1400, %v1402
        %1520 = vadd.xlane.f32.xlu0 %v1519
        %v1521 = vpop.xlane.xlu0 %1520
        %v1522 = vadd.f32 %v1404, %v1406
        %1523 = vadd.xlane.f32.xlu0 %v1522
        %v1524 = vpop.xlane.xlu0 %1523
        %v1525 = vadd.f32 %v1408, %v1410
        %1526 = vadd.xlane.f32.xlu0 %v1525
        %v1527 = vpop.xlane.xlu0 %1526
        %v1528 = vadd.f32 %v1412, %v1414
        %1529 = vadd.xlane.f32.xlu0 %v1528
        %v1530 = vpop.xlane.xlu0 %1529
        %v1531 = vadd.f32 %v1416, %v1418
        %1532 = vadd.xlane.f32.xlu0 %v1531
        %v1533 = vpop.xlane.xlu0 %1532
        %v1534 = vadd.f32 %v1420, %v1422
        %1535 = vadd.xlane.f32.xlu0 %v1534
        %v1536 = vpop.xlane.xlu0 %1535
        %v1537 = vadd.f32 %v1424, %v1426
        %1538 = vadd.xlane.f32.xlu0 %v1537
        %v1539 = vpop.xlane.xlu0 %1538
        %v1540 = vadd.f32 %v1428, %v1430
        %1541 = vadd.xlane.f32.xlu0 %v1540
        %v1542 = vpop.xlane.xlu0 %1541
        %v1543 = vadd.f32 %v1432, %v1434
        %1544 = vadd.xlane.f32.xlu0 %v1543
        %v1545 = vpop.xlane.xlu0 %1544
        %v1546 = vadd.f32 %v1436, %v1438
        %1547 = vadd.xlane.f32.xlu0 %v1546
        %v1548 = vpop.xlane.xlu0 %1547
        %v1549 = vadd.f32 %v1440, %v1442
        %1550 = vadd.xlane.f32.xlu0 %v1549
        %v1551 = vpop.xlane.xlu0 %1550
        %v1552 = vadd.f32 %v1444, %v1446
        %1553 = vadd.xlane.f32.xlu0 %v1552
        %v1554 = vpop.xlane.xlu0 %1553
        %v1555 = vadd.f32 %v1448, %v1450
        %1556 = vadd.xlane.f32.xlu0 %v1555
        %v1557 = vpop.xlane.xlu0 %1556
        %v1558 = vadd.f32 %v1452, %v1454
        %1559 = vadd.xlane.f32.xlu0 %v1558
        %v1560 = vpop.xlane.xlu0 %1559
        %v1561 = vadd.f32 %v1456, %v1458
        %1562 = vadd.xlane.f32.xlu0 %v1561
        %v1563 = vpop.xlane.xlu0 %1562
        %v1564 = vadd.f32 %v1460, %v1462
        %1565 = vadd.xlane.f32.xlu0 %v1564
        %v1566 = vpop.xlane.xlu0 %1565
        %v1567 = vadd.f32 %v1464, %v1466
        %1568 = vadd.xlane.f32.xlu0 %v1567
        %v1569 = vpop.xlane.xlu0 %1568
        %v1570 = vadd.f32 %v1468, %v1470
        %1571 = vadd.xlane.f32.xlu0 %v1570
        %v1572 = vpop.xlane.xlu0 %1571
        %v1573 = vadd.f32 %v1472, %v1474
        %1574 = vadd.xlane.f32.xlu0 %v1573
        %v1575 = vpop.xlane.xlu0 %1574
        %v1576 = vadd.f32 %v1476, %v1478
        %1577 = vadd.xlane.f32.xlu0 %v1576
        %v1578 = vpop.xlane.xlu0 %1577
        %v1579 = vadd.f32 %v1480, %v1482
        %1580 = vadd.xlane.f32.xlu0 %v1579
        %v1581 = vpop.xlane.xlu0 %1580
        %v1582 = vadd.f32 %v1484, %v1486
        %1583 = vadd.xlane.f32.xlu0 %v1582
        %v1584 = vpop.xlane.xlu0 %1583
        %v1585 = vadd.f32 %v1488, %v1490
        %1586 = vadd.xlane.f32.xlu0 %v1585
        %v1587 = vpop.xlane.xlu0 %1586
        %v1588 = vadd.f32 %v1492, %v1494
        %1589 = vadd.xlane.f32.xlu0 %v1588
        %v1590 = vpop.xlane.xlu0 %1589
        %v1591 = vrcp.pop %v1497
        %v1592 = vrcp.pop %v1500
        %v1593 = vrcp.pop %v1503
        %v1594 = vrcp.pop %v1506
        %v1595 = vrcp.pop %v1509
        %v1596 = vrcp.pop %v1512
        %v1597 = vrcp.pop %v1515
        %v1598 = vrcp.pop %v1518
        %v1599 = vrcp.pop %v1521
        %v1600 = vrcp.pop %v1524
        %v1601 = vrcp.pop %v1527
        %v1602 = vrcp.pop %v1530
        %v1603 = vrcp.pop %v1533
        %v1604 = vrcp.pop %v1536
        %v1605 = vrcp.pop %v1539
        %v1606 = vrcp.pop %v1542
        %v1607 = vrcp.pop %v1545
        %v1608 = vrcp.pop %v1548
        %v1609 = vrcp.pop %v1551
        %v1610 = vrcp.pop %v1554
        %v1611 = vrcp.pop %v1557
        %v1612 = vrcp.pop %v1560
        %v1613 = vrcp.pop %v1563
        %v1614 = vrcp.pop %v1566
        %v1615 = vrcp.pop %v1569
        %v1616 = vrcp.pop %v1572
        %v1617 = vrcp.pop %v1575
        %v1618 = vrcp.pop %v1578
        %v1619 = vrcp.pop %v1581
        %v1620 = vrcp.pop %v1584
        %v1621 = vrcp.pop %v1587
        %v1622 = vrcp.pop %v1590
        %v1623 = vmul.f32 %v1368, %v1591
        %v1624 = vmul.f32 %v1370, %v1591
        %v1625 = vmul.f32 %v1372, %v1592
        %v1626 = vmul.f32 %v1374, %v1592
        %v1627 = vmul.f32 %v1376, %v1593
        %v1628 = vmul.f32 %v1378, %v1593
        %v1629 = vmul.f32 %v1380, %v1594
        %v1630 = vmul.f32 %v1382, %v1594
        %v1631 = vmul.f32 %v1384, %v1595
        %v1632 = vmul.f32 %v1386, %v1595
        %v1633 = vmul.f32 %v1388, %v1596
        %v1634 = vmul.f32 %v1390, %v1596
        %v1635 = vmul.f32 %v1392, %v1597
        %v1636 = vmul.f32 %v1394, %v1597
        %v1637 = vmul.f32 %v1396, %v1598
        %v1638 = vmul.f32 %v1398, %v1598
        %v1639 = vmul.f32 %v1400, %v1599
        %v1640 = vmul.f32 %v1402, %v1599
        %v1641 = vmul.f32 %v1404, %v1600
        %v1642 = vmul.f32 %v1406, %v1600
        %v1643 = vmul.f32 %v1408, %v1601
        %v1644 = vmul.f32 %v1410, %v1601
        %v1645 = vmul.f32 %v1412, %v1602
        %v1646 = vmul.f32 %v1414, %v1602
        %v1647 = vmul.f32 %v1416, %v1603
        %v1648 = vmul.f32 %v1418, %v1603
        %v1649 = vmul.f32 %v1420, %v1604
        %v1650 = vmul.f32 %v1422, %v1604
        %v1651 = vmul.f32 %v1424, %v1605
        %v1652 = vmul.f32 %v1426, %v1605
        %v1653 = vmul.f32 %v1428, %v1606
        %v1654 = vmul.f32 %v1430, %v1606
        %v1655 = vmul.f32 %v1432, %v1607
        %v1656 = vmul.f32 %v1434, %v1607
        %v1657 = vmul.f32 %v1436, %v1608
        %v1658 = vmul.f32 %v1438, %v1608
        %v1659 = vmul.f32 %v1440, %v1609
        %v1660 = vmul.f32 %v1442, %v1609
        %v1661 = vmul.f32 %v1444, %v1610
        %v1662 = vmul.f32 %v1446, %v1610
        %v1663 = vmul.f32 %v1448, %v1611
        %v1664 = vmul.f32 %v1450, %v1611
        %v1665 = vmul.f32 %v1452, %v1612
        %v1666 = vmul.f32 %v1454, %v1612
        %v1667 = vmul.f32 %v1456, %v1613
        %v1668 = vmul.f32 %v1458, %v1613
        %v1669 = vmul.f32 %v1460, %v1614
        %v1670 = vmul.f32 %v1462, %v1614
        %v1671 = vmul.f32 %v1464, %v1615
        %v1672 = vmul.f32 %v1466, %v1615
        %v1673 = vmul.f32 %v1468, %v1616
        %v1674 = vmul.f32 %v1470, %v1616
        %v1675 = vmul.f32 %v1472, %v1617
        %v1676 = vmul.f32 %v1474, %v1617
        %v1677 = vmul.f32 %v1476, %v1618
        %v1678 = vmul.f32 %v1478, %v1618
        %v1679 = vmul.f32 %v1480, %v1619
        %v1680 = vmul.f32 %v1482, %v1619
        %v1681 = vmul.f32 %v1484, %v1620
        %v1682 = vmul.f32 %v1486, %v1620
        %v1683 = vmul.f32 %v1488, %v1621
        %v1684 = vmul.f32 %v1490, %v1621
        %v1685 = vmul.f32 %v1492, %v1622
        %v1686 = vmul.f32 %v1494, %v1622
        %v1687 = vpack.c.bf16 %v1625, %v1623
        %v1688 = vpack.c.bf16 %v1626, %v1624
        %v1689 = vpack.c.bf16 %v1629, %v1627
        %v1690 = vpack.c.bf16 %v1630, %v1628
        %v1691 = vpack.c.bf16 %v1633, %v1631
        %v1692 = vpack.c.bf16 %v1634, %v1632
        %v1693 = vpack.c.bf16 %v1637, %v1635
        %v1694 = vpack.c.bf16 %v1638, %v1636
        %v1695 = vpack.c.bf16 %v1641, %v1639
        %v1696 = vpack.c.bf16 %v1642, %v1640
        %v1697 = vpack.c.bf16 %v1645, %v1643
        %v1698 = vpack.c.bf16 %v1646, %v1644
        %v1699 = vpack.c.bf16 %v1649, %v1647
        %v1700 = vpack.c.bf16 %v1650, %v1648
        %v1701 = vpack.c.bf16 %v1653, %v1651
        %v1702 = vpack.c.bf16 %v1654, %v1652
        %v1703 = vpack.c.bf16 %v1657, %v1655
        %v1704 = vpack.c.bf16 %v1658, %v1656
        %v1705 = vpack.c.bf16 %v1661, %v1659
        %v1706 = vpack.c.bf16 %v1662, %v1660
        %v1707 = vpack.c.bf16 %v1665, %v1663
        %v1708 = vpack.c.bf16 %v1666, %v1664
        %v1709 = vpack.c.bf16 %v1669, %v1667
        %v1710 = vpack.c.bf16 %v1670, %v1668
        %v1711 = vpack.c.bf16 %v1673, %v1671
        %v1712 = vpack.c.bf16 %v1674, %v1672
        %v1713 = vpack.c.bf16 %v1677, %v1675
        %v1714 = vpack.c.bf16 %v1678, %v1676
        %v1715 = vpack.c.bf16 %v1681, %v1679
        %v1716 = vpack.c.bf16 %v1682, %v1680
        %v1717 = vpack.c.bf16 %v1685, %v1683
        %v1718 = vpack.c.bf16 %v1686, %v1684
        %v1720 = vunpack.c.l.b16 %v944
        %v1721 = vunpack.c.h.b16 %v944
        %v1722 = vpack.c.b16 %v1720, %v1720
        %v1723 = vpack.c.b16 %v1721, %v1721
        %1726 = vmatprep.subr.bf16.mxu0 %v1688
        %1727 = vmatpush1.bf16.xpose.msra.mxu0 %v1687
        %1728 = vmatprep.subr.bf16.mxu0 %v1690
        %1729 = vmatpush1.bf16.xpose.msra.mxu0 %v1689
        %1730 = vmatprep.subr.bf16.mxu0 %v1692
        %1731 = vmatpush1.bf16.xpose.msra.mxu0 %v1691
        %1732 = vmatprep.subr.bf16.mxu0 %v1694
        %1733 = vmatpush1.bf16.xpose.msra.mxu0 %v1693
        %1734 = vmatprep.subr.bf16.mxu0 %v1696
        %1735 = vmatpush1.bf16.xpose.msra.mxu0 %v1695
        %1736 = vmatprep.subr.bf16.mxu0 %v1698
        %1737 = vmatpush1.bf16.xpose.msra.mxu0 %v1697
        %1738 = vmatprep.subr.bf16.mxu0 %v1700
        %1739 = vmatpush1.bf16.xpose.msra.mxu0 %v1699
        %1740 = vmatprep.subr.bf16.mxu0 %v1702
        %1741 = vmatpush1.bf16.xpose.msra.mxu0 %v1701
        %1742 = vmatprep.subr.bf16.mxu0 %v1704
        %1743 = vmatpush1.bf16.xpose.msra.mxu0 %v1703
        %1744 = vmatprep.subr.bf16.mxu0 %v1706
        %1745 = vmatpush1.bf16.xpose.msra.mxu0 %v1705
        %1746 = vmatprep.subr.bf16.mxu0 %v1708
        %1747 = vmatpush1.bf16.xpose.msra.mxu0 %v1707
        %1748 = vmatprep.subr.bf16.mxu0 %v1710
        %1749 = vmatpush1.bf16.xpose.msra.mxu0 %v1709
        %1750 = vmatprep.subr.bf16.mxu0 %v1712
        %1751 = vmatpush1.bf16.xpose.msra.mxu0 %v1711
        %1752 = vmatprep.subr.bf16.mxu0 %v1714
        %1753 = vmatpush1.bf16.xpose.msra.mxu0 %v1713
        %1754 = vmatprep.subr.bf16.mxu0 %v1716
        %1755 = vmatpush1.bf16.xpose.msra.mxu0 %v1715
        %1756 = vmatprep.subr.bf16.mxu0 %v1718
        %1757 = vmatpush1.bf16.xpose.msra.mxu0 %v1717
        %1758 = vmatprep.mubr.bf16.mxu0 %v1723
        %1759 = vmatmul.mubr.bf16.gmra.mrb[0].mxu0 %v1722
        %v1760 = vpop.f32.mrb[0].mxu0
        %v1761 = vadd.f32 0.0, %v1760
        %v1762 = vpop.f32.mrb[0].mxu0
        %v1763 = vadd.f32 0.0, %v1762
        %v1764 = vpop.f32.mrb[0].mxu0
        %v1765 = vpop.f32.mrb[0].mxu0
        %1766 = vdwg.mxu0
        %v1769 = vcombine.low %v1761, %v1763
        %1771 = vst [vmem:[%s275] sm:$0xff] %v1769
        %1772 = vst [vmem:[%s282] sm:$0xff] %v1623
        %1773 = vst [vmem:[%s282 + $0x8] sm:$0xff] %v1624
        %1774 = vst [vmem:[%s282 + $0x10] sm:$0xff] %v1625
        %1775 = vst [vmem:[%s282 + $0x18] sm:$0xff] %v1626
        %1776 = vst [vmem:[%s282 + $0x20] sm:$0xff] %v1627
        %1777 = vst [vmem:[%s282 + $0x28] sm:$0xff] %v1628
        %1778 = vst [vmem:[%s282 + $0x30] sm:$0xff] %v1629
        %1779 = vst [vmem:[%s282 + $0x38] sm:$0xff] %v1630
        %1780 = vst [vmem:[%s282 + $0x40] sm:$0xff] %v1631
        %1781 = vst [vmem:[%s282 + $0x48] sm:$0xff] %v1632
        %1782 = vst [vmem:[%s282 + $0x50] sm:$0xff] %v1633
        %1783 = vst [vmem:[%s282 + $0x58] sm:$0xff] %v1634
        %1784 = vst [vmem:[%s282 + $0x60] sm:$0xff] %v1635
        %1785 = vst [vmem:[%s282 + $0x68] sm:$0xff] %v1636
        %1786 = vst [vmem:[%s282 + $0x70] sm:$0xff] %v1637
        %1787 = vst [vmem:[%s282 + $0x78] sm:$0xff] %v1638
        %1788 = vst [vmem:[%s282 + $0x80] sm:$0xff] %v1639
        %1789 = vst [vmem:[%s282 + $0x88] sm:$0xff] %v1640
        %1790 = vst [vmem:[%s282 + $0x90] sm:$0xff] %v1641
        %1791 = vst [vmem:[%s282 + $0x98] sm:$0xff] %v1642
        %1792 = vst [vmem:[%s282 + $0xa0] sm:$0xff] %v1643
        %1793 = vst [vmem:[%s282 + $0xa8] sm:$0xff] %v1644
        %1794 = vst [vmem:[%s282 + $0xb0] sm:$0xff] %v1645
        %1795 = vst [vmem:[%s282 + $0xb8] sm:$0xff] %v1646
        %1796 = vst [vmem:[%s282 + $0xc0] sm:$0xff] %v1647
        %1797 = vst [vmem:[%s282 + $0xc8] sm:$0xff] %v1648
        %1798 = vst [vmem:[%s282 + $0xd0] sm:$0xff] %v1649
        %1799 = vst [vmem:[%s282 + $0xd8] sm:$0xff] %v1650
        %1800 = vst [vmem:[%s282 + $0xe0] sm:$0xff] %v1651
        %1801 = vst [vmem:[%s282 + $0xe8] sm:$0xff] %v1652
        %1802 = vst [vmem:[%s282 + $0xf0] sm:$0xff] %v1653
        %1803 = vst [vmem:[%s282 + $0xf8] sm:$0xff] %v1654
        %1804 = vst [vmem:[%s282 + $0x100] sm:$0xff] %v1655
        %1805 = vst [vmem:[%s282 + $0x108] sm:$0xff] %v1656
        %1806 = vst [vmem:[%s282 + $0x110] sm:$0xff] %v1657
        %1807 = vst [vmem:[%s282 + $0x118] sm:$0xff] %v1658
        %1808 = vst [vmem:[%s282 + $0x120] sm:$0xff] %v1659
        %1809 = vst [vmem:[%s282 + $0x128] sm:$0xff] %v1660
        %1810 = vst [vmem:[%s282 + $0x130] sm:$0xff] %v1661
        %1811 = vst [vmem:[%s282 + $0x138] sm:$0xff] %v1662
        %1812 = vst [vmem:[%s282 + $0x140] sm:$0xff] %v1663
        %1813 = vst [vmem:[%s282 + $0x148] sm:$0xff] %v1664
        %1814 = vst [vmem:[%s282 + $0x150] sm:$0xff] %v1665
        %1815 = vst [vmem:[%s282 + $0x158] sm:$0xff] %v1666
        %1816 = vst [vmem:[%s282 + $0x160] sm:$0xff] %v1667
        %1817 = vst [vmem:[%s282 + $0x168] sm:$0xff] %v1668
        %1818 = vst [vmem:[%s282 + $0x170] sm:$0xff] %v1669
        %1819 = vst [vmem:[%s282 + $0x178] sm:$0xff] %v1670
        %1820 = vst [vmem:[%s282 + $0x180] sm:$0xff] %v1671
        %1821 = vst [vmem:[%s282 + $0x188] sm:$0xff] %v1672
        %1822 = vst [vmem:[%s282 + $0x190] sm:$0xff] %v1673
        %1823 = vst [vmem:[%s282 + $0x198] sm:$0xff] %v1674
        %1824 = vst [vmem:[%s282 + $0x1a0] sm:$0xff] %v1675
        %1825 = vst [vmem:[%s282 + $0x1a8] sm:$0xff] %v1676
        %1826 = vst [vmem:[%s282 + $0x1b0] sm:$0xff] %v1677
        %1827 = vst [vmem:[%s282 + $0x1b8] sm:$0xff] %v1678
        %1828 = vst [vmem:[%s282 + $0x1c0] sm:$0xff] %v1679
        %1829 = vst [vmem:[%s282 + $0x1c8] sm:$0xff] %v1680
        %1830 = vst [vmem:[%s282 + $0x1d0] sm:$0xff] %v1681
        %1831 = vst [vmem:[%s282 + $0x1d8] sm:$0xff] %v1682
        %1832 = vst [vmem:[%s282 + $0x1e0] sm:$0xff] %v1683
        %1833 = vst [vmem:[%s282 + $0x1e8] sm:$0xff] %v1684
        %1834 = vst [vmem:[%s282 + $0x1f0] sm:$0xff] %v1685
        %1835 = vst [vmem:[%s282 + $0x1f8] sm:$0xff] %v1686
        %s1836 = sand.u32 %s165, 1
        %s1837 = scalar_lea.sflag [#allocation5], %s1836
        %s1838 = sand.u32 %s165, 1
        %s1839 = smul.addr %s1838, 8
        %s1840 = scalar_lea.vmem [#allocation4], %s1839
        %s1841 = sand.u32 %s195, 1
        %s1842 = scalar_lea.sflag [#allocation7], %s1841
        %s1843 = sand.u32 %s195, 1
        %s1844 = smul.addr %s1843, 512
        %s1845 = scalar_lea.vmem [#allocation6], %s1844
        // Predicated region
        $region45: #{tpu_custom_call.1} parent=39 // pred_check
          %p1846 = pneg %p175
        $region46: #{tpu_custom_call.1} parent=39 // pred_check_branch
          %1848 = sbr.rel (%p1846) target = $region48
        $region47: #{tpu_custom_call.1} parent=39 // pred_region
          %s1849 = sadd.s32 %s30, %s31
          %s1850 = smul.u32 2, %s1849
          %s1852 = ssub.s32 128, 128
          %1853 = vsyncadd %s1837, %s1852
          %s1854 = smul.addr %s29, 2
          %s1855 = sadd.s32 %s1850, %s1854
          %s1856 = smul.addr %s1855, 64
          %s1857 = scalar_lea.hbm %s5, %s1856
          %s1859 = sshll.u32 %s1840, 4
          %s1860 = int_to_ptr.vmem [resolvable:$true] %s1859
          %1862 = dma.vmem_to_hbm [thread:$0]  %s1860, 128, %s1857, %s1837
        $region48: #{tpu_custom_call.1} parent=39 // pred_fallthru
          _
        // Predicated region
        $region49: #{tpu_custom_call.1} parent=39 // pred_check
          %p1863 = pneg %p205
        $region50: #{tpu_custom_call.1} parent=39 // pred_check_branch
          %1865 = sbr.rel (%p1863) target = $region52
        $region51: #{tpu_custom_call.1} parent=39 // pred_region
          %s1866 = sadd.s32 %s30, %s31
          %s1867 = smul.u32 32, %s1866
          %s1869 = ssub.s32 8192, 8192
          %1870 = vsyncadd %s1842, %s1869
          %s1871 = smul.addr %s1867, 2
          %s1872 = smul.addr %s29, 64
          %s1873 = sadd.s32 %s1871, %s1872
          %s1874 = smul.addr %s1873, 128
          %s1875 = scalar_lea.hbm %s6, %s1874
          %s1876 = sshll.u32 %s1845, 4
          %s1877 = int_to_ptr.vmem [resolvable:$true] %s1876
          %1882 = dma.vmem_to_hbm [thread:$0]  %s1877, 8192, %s1875, %s1842, 256, 256, 16
        $region52: #{tpu_custom_call.1} parent=39 // pred_fallthru
          _
      $region40: #{tpu_custom_call.1} parent=5 // pred_fallthru
        _
      %p1883 = scmp.le.s32.totalorder 2, %s19
      // Predicated region
      $region53: #{tpu_custom_call.1} parent=5 // pred_check
        %p1884 = pneg %p1883
      $region54: #{tpu_custom_call.1} parent=5 // pred_check_branch
        %1886 = sbr.rel (%p1884) target = $region56
      $region55: #{tpu_custom_call.1} parent=5 // pred_region
        %s1887 = ssub.s32 %s19, 2
        // Predicated region
        $region57: #{tpu_custom_call.1} parent=55 // pred_check
          %p1888 = pneg %p181
        $region58: #{tpu_custom_call.1} parent=55 // pred_check_branch
          %1890 = sbr.rel (%p1888) target = $region60
        $region59: #{tpu_custom_call.1} parent=55 // pred_region
          %s1891 = sand.u32 %s166, 1
          %s1892 = scalar_lea.sflag [#allocation5], %s1891
          %s1893 = sand.u32 %s166, 1
          %s1894 = smul.addr %s1893, 8
          %s1895 = scalar_lea.vmem [#allocation4], %s1894
          %1896 = dma.done %s1892, 128
        $region60: #{tpu_custom_call.1} parent=55 // pred_fallthru
          _
        // Predicated region
        $region61: #{tpu_custom_call.1} parent=55 // pred_check
          %p1897 = pneg %p211
        $region62: #{tpu_custom_call.1} parent=55 // pred_check_branch
          %1899 = sbr.rel (%p1897) target = $region64
        $region63: #{tpu_custom_call.1} parent=55 // pred_region
          %s1900 = sand.u32 %s196, 1
          %s1901 = scalar_lea.sflag [#allocation7], %s1900
          %s1902 = sand.u32 %s196, 1
          %s1903 = smul.addr %s1902, 512
          %s1904 = scalar_lea.vmem [#allocation6], %s1903
          %1905 = dma.done %s1901, 8192
        $region64: #{tpu_custom_call.1} parent=55 // pred_fallthru
          _
      $region56: #{tpu_custom_call.1} parent=5 // pred_fallthru
        _
    $region6: #{tpu_custom_call.1} parent=1 // loop_footer
      %s23 = sadd.s32 1, %s19
    $region7: #{tpu_custom_call.1} parent=1 // loop_footer_branch
      %18 = sbr.rel target = $region3
    $region8: #{tpu_custom_call.1} parent=1 // loop_exit
      _
    %1906 = vsyncpa [#allocation5], 1
    %s1907 = scalar_lea.sflag [#allocation5], 1
    %1908 = vsyncpa %s1907, 1
    %1909 = vsyncpa [#allocation7], 1
    %s1910 = scalar_lea.sflag [#allocation7], 1
    %1911 = vsyncpa %s1910, 1

</llo_original>
